<compile_context>
chip_gen: v7x
topology: tpu7x:2x2x1
jax: 0.10.0
libtpu: 0.0.40
codegen_flags: <defaults>
</compile_context>

<pallas_src>
import math
from types import SimpleNamespace

import jax
import jax.numpy as jnp
from jax.experimental import pallas as pl
from jax.experimental.pallas import tpu as pltpu


# ----------------------------------------------------------------------------
# Fused kernel builder
# ----------------------------------------------------------------------------
def _build_fused_kernel(bs, C, seq_sizes, scale_lens, step_size, has_time,
                        layer_Ms, wcat_offsets, Ntot):
    """One kernel processes the whole block for the whole batch.

    seq_sizes:   per-scale input point counts        (len = S)
    scale_lens:  prefix sums -> active length L_i at scale i
    layer_Ms:    num_centers per attention layer
    wcat_offsets: static row offset of each layer inside the packed Wcat slab
    """
    S = len(seq_sizes)
    ncol = 2 if has_time else 1

    def kernel(*refs):
        xs_refs = refs[:S]                       # each [bs, C, N_i]
        wcat_ref = refs[S]                       # [sum_t pad8(M_t+C), C]
        wtxv_ref = refs[S + 1]                   # [n_layers*C, M_max]
        vec_ref = refs[S + 2]                    # [C, ncol*n_layers]  (bt | te)
        o_ref = refs[S + 3]                      # [bs, (S+1)*C, Ntot]
        xbuf = refs[S + 4]                       # VMEM scratch [C, bs*Ntot]

        # ---- assemble per-batch cat(xs, dim=2) once; also emit xs_out[0] rows ----
        for b in range(bs):
            off = 0
            for i in range(S):
                n_i = seq_sizes[i]
                v = xs_refs[i][b]                                    # [C, n_i]
                xbuf[:, b * Ntot + off:b * Ntot + off + n_i] = v
                o_ref[b, 0:C, off:off + n_i] = v
                off += n_i

        t = 0
        for i in range(S):
            L = scale_lens[i]
            # Work array: both batches' active prefixes lane-concatenated -> [C, bs*L].
            if L == Ntot:
                x = xbuf[...]
            else:
                x = jnp.concatenate(
                    [xbuf[:, b * Ntot:b * Ntot + L] for b in range(bs)], axis=1)

            for _ in range(step_size):
                M = layer_Ms[t]
                roff = wcat_offsets[t]
                wcat = wcat_ref[roff:roff + M + C, :]                # [M+C, C]
                wtxv = wtxv_ref[t * C:(t + 1) * C, 0:M]              # [C, M]
                bt = vec_ref[:, ncol * t:ncol * t + 1]               # [C, 1]
                if has_time:
                    te = vec_ref[:, ncol * t + 1:ncol * t + 2]       # [C, 1]
                    x = x + te                                       # lane-broadcast add

                # One fused matmul: rows 0..M = centers^T@wq@x (energy),
                #                   rows M..M+C = wt_f @ x.
                y = jnp.dot(wcat, x, preferred_element_type=jnp.float32)   # [M+C, bs*L]
                energy = y[0:M, :]
                wt_x = y[M:M + C, :]

                # softmax over centers (axis 0 here == torch dim=-1 of [bs,N,M])
                energy = energy - jnp.max(energy, axis=0, keepdims=True)
                e = jnp.exp(energy)
                attn = e * pl.reciprocal(jnp.sum(e, axis=0, keepdims=True),
                                         approx=True)                       # [M, bs*L]

                # renormalize over the point axis (torch dim=1), per batch slice
                parts = []
                for b in range(bs):
                    a_b = attn[:, b * L:(b + 1) * L]
                    col = jnp.sum(a_b, axis=1, keepdims=True)                # [M, 1]
                    parts.append(a_b * pl.reciprocal(1e-9 + col, approx=True))
                attn = parts[0] if bs == 1 else jnp.concatenate(parts, axis=1)

                # trans_conv(x_r - x) -> BN(eval, folded) -> ReLU, residual add,
                # with trans_conv @ v_conv(centers) pre-folded on the host.
                tr = jnp.dot(wtxv, attn, preferred_element_type=jnp.float32) - wt_x + bt
                x = x + jnp.maximum(tr, 0.0)
                t += 1

            # xs_out[i+1] = cat([x] + xs[i+1:], dim=2); carry processed prefix in xbuf.
            for b in range(bs):
                o_ref[b, (i + 1) * C:(i + 2) * C, 0:L] = x[:, b * L:(b + 1) * L]
                if L < Ntot:
                    o_ref[b, (i + 1) * C:(i + 2) * C, L:Ntot] = \
                        xbuf[:, b * Ntot + L:(b + 1) * Ntot]
                if i < S - 1:
                    xbuf[:, b * Ntot:b * Ntot + L] = x[:, b * L:(b + 1) * L]

    return kernel


# ----------------------------------------------------------------------------
# Host-side parameter preparation (hoists all batch-independent work)
# ----------------------------------------------------------------------------
def l2norm(x, axis=0):
    return x / (1e-6 + jnp.linalg.norm(x, axis=axis, keepdims=True))


def sinusoidal_pos_emb(t, dim):
    half = dim // 2
    emb = math.log(10000.0) / (half - 1)
    freqs = jnp.exp(jnp.arange(half, dtype=jnp.float32) * -emb)
    arg = jnp.float32(t) * freqs
    return jnp.concatenate([jnp.sin(arg), jnp.cos(arg)], axis=-1)      # [dim]


def time_embed(t, tp, time_dim):
    """time_mlp(full([bs], t)) is identical across the batch -> compute once."""
    h = sinusoidal_pos_emb(t, time_dim)                                # [time_dim]
    h = tp["w1"] @ h + tp["b1"]                                        # [C]
    h = jax.nn.gelu(h, approximate=False)                              # torch nn.GELU default
    h = tp["w2"] @ h + tp["b2"]                                        # [C]
    return h


def prepare_packed_params(params, cfg):
    """Pack all per-layer operands into 3 slabs:
       Wcat_all [sum pad8(M_t+C), C], Wtxv_all [n_layers*C, M_max], vec_all [C, k]."""
    C = cfg.global_channels
    has_time = cfg.time_dim > 0
    eps = 1e-5

    wcat_blocks, wtxv_blocks, vec_cols = [], [], []
    wcat_offsets, Ms = [], []
    M_max = max(int(m) for m in cfg.num_centers)
    roff = 0
    for t in range(cfg.num_attn_layers):
        p = params["layers"][t]
        M = int(p["centers"].shape[1])
        Ms.append(M)

        scale = p["gamma"] / jnp.sqrt(p["running_var"] + eps)
        shift = p["beta"] - p["running_mean"] * scale
        wt_f = scale[:, None] * p["wt"]                                # BN folded
        bt_f = scale * p["bt"] + shift                                 # [C]

        cwq = p["centers"].T @ p["wq"]                                 # [M, C]
        xv = p["wv"] @ p["centers"] + p["bv"][:, None]                 # [C, M]
        wtxv = wt_f @ xv                                               # [C, M]

        wcat = jnp.concatenate([cwq, wt_f], axis=0)                    # [M+C, C]
        rows = wcat.shape[0]
        pad = (-rows) % 8                                              # keep slabs 8-aligned
        if pad:
            wcat = jnp.pad(wcat, ((0, pad), (0, 0)))
        wcat_offsets.append(roff)
        roff += rows + pad
        wcat_blocks.append(wcat)

        wtxv_blocks.append(jnp.pad(wtxv, ((0, 0), (0, M_max - M))))

        cols = [bt_f[:, None]]
        if has_time:
            cols.append(time_embed(t, params["time_mlp"], cfg.time_dim)[:, None])
        vec_cols.append(jnp.concatenate(cols, axis=1))

    wcat_all = jnp.concatenate(wcat_blocks, axis=0).astype(jnp.float32)
    wtxv_all = jnp.concatenate(wtxv_blocks, axis=0).astype(jnp.float32)
    vec_all = jnp.concatenate(vec_cols, axis=1).astype(jnp.float32)
    return wcat_all, wtxv_all, vec_all, tuple(wcat_offsets), tuple(Ms)


# ----------------------------------------------------------------------------
# Forward pass (DiffTransformerBlock)
# ----------------------------------------------------------------------------
def diff_transformer_block_forward(xs, f_p, params, cfg, q_size, step_size):
    """xs: list of [bs, C, N_i] (NCW).  Returns [bs, (len(q_size)+1)*C, sum(N_i)]."""
    del f_p  # passed to TCenterAttentionLayer.forward by the reference, but unused there
    assert cfg.num_heads == 1          # TODO(synk): num_heads > 1 not implemented
    assert cfg.local_channels == 0     # fuse_conv is never used by the reference forward

    S = len(q_size)
    assert len(xs) == S and S * step_size == cfg.num_attn_layers
    bs, C, _ = xs[0].shape
    seq_sizes = tuple(int(x.shape[2]) for x in xs)
    scale_lens = tuple(sum(seq_sizes[:i + 1]) for i in range(S))
    Ntot = scale_lens[-1]
    has_time = cfg.time_dim > 0

    wcat_all, wtxv_all, vec_all, wcat_offsets, Ms = prepare_packed_params(params, cfg)
    kernel = _build_fused_kernel(bs, C, seq_sizes, scale_lens, step_size, has_time,
                                 Ms, wcat_offsets, Ntot)

    inputs = list(xs) + [wcat_all, wtxv_all, vec_all]

    def _const_map(ndim):
        return lambda i: (0,) * ndim

    in_specs = [pl.BlockSpec(arr.shape, _const_map(arr.ndim)) for arr in inputs]

    grid_spec = pltpu.PrefetchScalarGridSpec(
        num_scalar_prefetch=0,
        grid=(1,),                      # whole block + whole batch in one step
        in_specs=in_specs,
        out_specs=pl.BlockSpec((bs, (S + 1) * C, Ntot), lambda i: (0, 0, 0)),
        scratch_shapes=[pltpu.VMEM((C, bs * Ntot), jnp.float32)],
    )
    # VMEM footprint (bs=2, C=32, Ntot=256): inputs + packed weights + output +
    # scratch ≈ 0.5 MiB — far below every generation's limit.
    return pl.pallas_call(
        kernel,
        out_shape=jax.ShapeDtypeStruct((bs, (S + 1) * C, Ntot), xs[0].dtype),
        grid_spec=grid_spec,
        compiler_params=pltpu.CompilerParams(dimension_semantics=("arbitrary",)),
    )(*inputs)


# ----------------------------------------------------------------------------
# Deterministic parameter construction
# ----------------------------------------------------------------------------
def init_params(cfg, key):
    C = cfg.global_channels
    L = cfg.num_attn_layers
    ks = iter(jax.random.split(key, 8 * L + 4))

    layers = []
    for t in range(L):
        M = cfg.num_centers[t]
        centers = l2norm(
            jax.random.normal(next(ks), (C, M), jnp.float32) * math.sqrt(2.0 / M), axis=0)
        wq = jax.random.normal(next(ks), (C, C), jnp.float32) / math.sqrt(C)
        wv = jax.random.normal(next(ks), (C, C), jnp.float32) / math.sqrt(C)
        bv = 0.1 * jax.random.normal(next(ks), (C,), jnp.float32)
        wt = jax.random.normal(next(ks), (C, C), jnp.float32) / math.sqrt(C)
        bt = 0.1 * jax.random.normal(next(ks), (C,), jnp.float32)
        gamma = 1.0 + 0.1 * jax.random.normal(next(ks), (C,), jnp.float32)
        beta = 0.1 * jax.random.normal(next(ks), (C,), jnp.float32)
        layers.append(dict(centers=centers, wq=wq, wv=wv, bv=bv, wt=wt, bt=bt,
                           gamma=gamma, beta=beta,
                           running_mean=jnp.zeros((C,), jnp.float32),
                           running_var=jnp.ones((C,), jnp.float32)))

    time_mlp = None
    if cfg.time_dim > 0:
        td = cfg.time_dim  # learned_sinusoidal_cond=False -> time_dim unchanged
        time_mlp = dict(
            w1=jax.random.normal(next(ks), (C, td), jnp.float32) / math.sqrt(td),
            b1=0.1 * jax.random.normal(next(ks), (C,), jnp.float32),
            w2=jax.random.normal(next(ks), (C, C), jnp.float32) / math.sqrt(C),
            b2=0.1 * jax.random.normal(next(ks), (C,), jnp.float32),
        )
    return dict(layers=layers, time_mlp=time_mlp)


# ----------------------------------------------------------------------------
# Main
# ----------------------------------------------------------------------------
if __name__ == "__main__":
    cfg = SimpleNamespace(
        global_channels=32,
        num_attn_layers=2,
        num_centers=[64, 32],
        local_channels=0,
        num_heads=1,
        time_dim=16,
        learned_sinusoidal_cond=False,
    )
    q_size = [128, 128]      # len(q_size) scales; values here also set the xs point counts
    step_size = 1
    assert len(q_size) * step_size == cfg.num_attn_layers

    key = jax.random.PRNGKey(0)
    kp, kx0, kx1, kf = jax.random.split(key, 4)
    params = init_params(cfg, kp)

    bs, C = 2, cfg.global_channels
    xs = [jax.random.normal(kx0, (bs, C, q_size[0]), jnp.float32),
          jax.random.normal(kx1, (bs, C, q_size[1]), jnp.float32)]
    f_p = jax.random.normal(kf, (bs, C), jnp.float32)   # unused by the reference forward

    out = diff_transformer_block_forward(xs, f_p, params, cfg, q_size, step_size)
    out = jax.block_until_ready(out)

    expected = (bs, (len(q_size) + 1) * C, sum(q_size))
    assert out.shape == expected, (out.shape, expected)
    assert bool(jnp.all(jnp.isfinite(out)))
    print("KERNEL_OK")
</pallas_src>

<mosaic_0001>
module attributes {stable_mosaic.version = 11 : i64} {
  func.func @kernel(%arg0: i32, %arg1: memref<2x32x128xf32, #tpu.memory_space<vmem>>, %arg2: memref<2x32x128xf32, #tpu.memory_space<vmem>>, %arg3: memref<160x32xf32, #tpu.memory_space<vmem>>, %arg4: memref<64x64xf32, #tpu.memory_space<vmem>>, %arg5: memref<32x4xf32, #tpu.memory_space<vmem>>, %arg6: memref<2x96x256xf32, #tpu.memory_space<vmem>>, %arg7: memref<32x512xf32, #tpu.memory_space<vmem>>) attributes {dimension_semantics = [#tpu.dimension_semantics<arbitrary>], iteration_bounds = array<i64: 1>, scalar_prefetch = 0 : i64, scratch_operands = 1 : i64, tpu.core_type = #tpu.core_type<tc>, window_params = [{pipeline_mode = #tpu.pipeline_mode<synchronous>, transform_indices = @transform_0, window_bounds = array<i64: 2, 32, 128>}, {pipeline_mode = #tpu.pipeline_mode<synchronous>, transform_indices = @transform_1, window_bounds = array<i64: 2, 32, 128>}, {pipeline_mode = #tpu.pipeline_mode<synchronous>, transform_indices = @transform_2, window_bounds = array<i64: 160, 32>}, {pipeline_mode = #tpu.pipeline_mode<synchronous>, transform_indices = @transform_3, window_bounds = array<i64: 64, 64>}, {pipeline_mode = #tpu.pipeline_mode<synchronous>, transform_indices = @transform_4, window_bounds = array<i64: 32, 4>}, {pipeline_mode = #tpu.pipeline_mode<synchronous>, transform_indices = @transform_5, window_bounds = array<i64: 2, 96, 256>}]} {
    %c0 = arith.constant 0 : index
    %c0_0 = arith.constant 0 : index
    %c0_1 = arith.constant 0 : index
    %0 = vector.load %arg1[%c0, %c0_0, %c0_1] : memref<2x32x128xf32, #tpu.memory_space<vmem>>, vector<1x32x128xf32>
    %1 = vector.shape_cast %0 : vector<1x32x128xf32> to vector<32x128xf32>
    %c0_2 = arith.constant 0 : index
    %c0_3 = arith.constant 0 : index
    %2 = vector.load %arg7[%c0_2, %c0_3] : memref<32x512xf32, #tpu.memory_space<vmem>>, vector<32x128xf32>
    tpu.vector_store %arg7[%c0_2, %c0_3], %1 {strides = array<i32>} : memref<32x512xf32, #tpu.memory_space<vmem>>, vector<32x128xf32>,
    %c0_4 = arith.constant 0 : index
    %c0_5 = arith.constant 0 : index
    %c0_6 = arith.constant 0 : index
    %3 = vector.load %arg6[%c0_4, %c0_5, %c0_6] : memref<2x96x256xf32, #tpu.memory_space<vmem>>, vector<1x32x128xf32>
    %4 = vector.shape_cast %3 : vector<1x32x128xf32> to vector<32x128xf32>
    %5 = vector.shape_cast %1 : vector<32x128xf32> to vector<1x32x128xf32>
    tpu.vector_store %arg6[%c0_4, %c0_5, %c0_6], %5 {strides = array<i32>} : memref<2x96x256xf32, #tpu.memory_space<vmem>>, vector<1x32x128xf32>,
    %c0_7 = arith.constant 0 : index
    %c0_8 = arith.constant 0 : index
    %c0_9 = arith.constant 0 : index
    %6 = vector.load %arg2[%c0_7, %c0_8, %c0_9] : memref<2x32x128xf32, #tpu.memory_space<vmem>>, vector<1x32x128xf32>
    %7 = vector.shape_cast %6 : vector<1x32x128xf32> to vector<32x128xf32>
    %c0_10 = arith.constant 0 : index
    %c128 = arith.constant 128 : index
    %8 = vector.load %arg7[%c0_10, %c128] : memref<32x512xf32, #tpu.memory_space<vmem>>, vector<32x128xf32>
    tpu.vector_store %arg7[%c0_10, %c128], %7 {strides = array<i32>} : memref<32x512xf32, #tpu.memory_space<vmem>>, vector<32x128xf32>,
    %c0_11 = arith.constant 0 : index
    %c0_12 = arith.constant 0 : index
    %c128_13 = arith.constant 128 : index
    %9 = vector.load %arg6[%c0_11, %c0_12, %c128_13] : memref<2x96x256xf32, #tpu.memory_space<vmem>>, vector<1x32x128xf32>
    %10 = vector.shape_cast %9 : vector<1x32x128xf32> to vector<32x128xf32>
    %11 = vector.shape_cast %7 : vector<32x128xf32> to vector<1x32x128xf32>
    tpu.vector_store %arg6[%c0_11, %c0_12, %c128_13], %11 {strides = array<i32>} : memref<2x96x256xf32, #tpu.memory_space<vmem>>, vector<1x32x128xf32>,
    %c1 = arith.constant 1 : index
    %c0_14 = arith.constant 0 : index
    %c0_15 = arith.constant 0 : index
    %12 = vector.load %arg1[%c1, %c0_14, %c0_15] : memref<2x32x128xf32, #tpu.memory_space<vmem>>, vector<1x32x128xf32>
    %13 = vector.shape_cast %12 : vector<1x32x128xf32> to vector<32x128xf32>
    %c0_16 = arith.constant 0 : index
    %c256 = arith.constant 256 : index
    %14 = vector.load %arg7[%c0_16, %c256] : memref<32x512xf32, #tpu.memory_space<vmem>>, vector<32x128xf32>
    tpu.vector_store %arg7[%c0_16, %c256], %13 {strides = array<i32>} : memref<32x512xf32, #tpu.memory_space<vmem>>, vector<32x128xf32>,
    %c1_17 = arith.constant 1 : index
    %c0_18 = arith.constant 0 : index
    %c0_19 = arith.constant 0 : index
    %15 = vector.load %arg6[%c1_17, %c0_18, %c0_19] : memref<2x96x256xf32, #tpu.memory_space<vmem>>, vector<1x32x128xf32>
    %16 = vector.shape_cast %15 : vector<1x32x128xf32> to vector<32x128xf32>
    %17 = vector.shape_cast %13 : vector<32x128xf32> to vector<1x32x128xf32>
    tpu.vector_store %arg6[%c1_17, %c0_18, %c0_19], %17 {strides = array<i32>} : memref<2x96x256xf32, #tpu.memory_space<vmem>>, vector<1x32x128xf32>,
    %c1_20 = arith.constant 1 : index
    %c0_21 = arith.constant 0 : index
    %c0_22 = arith.constant 0 : index
    %18 = vector.load %arg2[%c1_20, %c0_21, %c0_22] : memref<2x32x128xf32, #tpu.memory_space<vmem>>, vector<1x32x128xf32>
    %19 = vector.shape_cast %18 : vector<1x32x128xf32> to vector<32x128xf32>
    %c0_23 = arith.constant 0 : index
    %c384 = arith.constant 384 : index
    %20 = vector.load %arg7[%c0_23, %c384] : memref<32x512xf32, #tpu.memory_space<vmem>>, vector<32x128xf32>
    tpu.vector_store %arg7[%c0_23, %c384], %19 {strides = array<i32>} : memref<32x512xf32, #tpu.memory_space<vmem>>, vector<32x128xf32>,
    %c1_24 = arith.constant 1 : index
    %c0_25 = arith.constant 0 : index
    %c128_26 = arith.constant 128 : index
    %21 = vector.load %arg6[%c1_24, %c0_25, %c128_26] : memref<2x96x256xf32, #tpu.memory_space<vmem>>, vector<1x32x128xf32>
    %22 = vector.shape_cast %21 : vector<1x32x128xf32> to vector<32x128xf32>
    %23 = vector.shape_cast %19 : vector<32x128xf32> to vector<1x32x128xf32>
    tpu.vector_store %arg6[%c1_24, %c0_25, %c128_26], %23 {strides = array<i32>} : memref<2x96x256xf32, #tpu.memory_space<vmem>>, vector<1x32x128xf32>,
    %c0_27 = arith.constant 0 : index
    %c0_28 = arith.constant 0 : index
    %24 = vector.load %arg7[%c0_27, %c0_28] : memref<32x512xf32, #tpu.memory_space<vmem>>, vector<32x128xf32>
    %c0_29 = arith.constant 0 : index
    %c256_30 = arith.constant 256 : index
    %25 = vector.load %arg7[%c0_29, %c256_30] : memref<32x512xf32, #tpu.memory_space<vmem>>, vector<32x128xf32>
    %26 = tpu.concatenate %24, %25 in 1 : vector<32x128xf32>, vector<32x128xf32> -> vector<32x256xf32>
    %c0_31 = arith.constant 0 : index
    %c0_32 = arith.constant 0 : index
    %27 = vector.load %arg3[%c0_31, %c0_32] : memref<160x32xf32, #tpu.memory_space<vmem>>, vector<96x32xf32>
    %c0_33 = arith.constant 0 : index
    %c0_34 = arith.constant 0 : index
    %28 = vector.load %arg4[%c0_33, %c0_34] : memref<64x64xf32, #tpu.memory_space<vmem>>, vector<32x64xf32>
    %c0_35 = arith.constant 0 : index
    %c0_36 = arith.constant 0 : index
    %29 = vector.load %arg5[%c0_35, %c0_36] : memref<32x4xf32, #tpu.memory_space<vmem>>, vector<32x1xf32>
    %c0_37 = arith.constant 0 : index
    %c1_38 = arith.constant 1 : index
    %30 = vector.load %arg5[%c0_37, %c1_38] : memref<32x4xf32, #tpu.memory_space<vmem>>, vector<32x1xf32>
    %31 = vector.broadcast %30 : vector<32x1xf32> to vector<32x256xf32>
    %32 = arith.addf %26, %31 : vector<32x256xf32>
    %cst = arith.constant dense<0.000000e+00> : vector<96x256xf32>
    %33 = tpu.matmul %27, %32, %cst {dimension_numbers = #tpu.dot_dimension_numbers<[1], [0], [0], [1], [0, 0, 1, 1], [], []>} : vector<96x32xf32>, vector<32x256xf32>, vector<96x256xf32> -> vector<96x256xf32>
    %34 = vector.extract_strided_slice %33 {offsets = [0, 0], sizes = [64, 256], strides = [1, 1]} : vector<96x256xf32> to vector<64x256xf32>
    %35 = vector.extract_strided_slice %33 {offsets = [64, 0], sizes = [32, 256], strides = [1, 1]} : vector<96x256xf32> to vector<32x256xf32>
    %cst_39 = arith.constant dense<0xFF800000> : vector<256xf32>
    %36 = vector.multi_reduction <maximumf>, %34, %cst_39 [0] : vector<64x256xf32> to vector<256xf32>
    %37 = vector.shape_cast %36 : vector<256xf32> to vector<1x256xf32>
    %38 = vector.broadcast %37 : vector<1x256xf32> to vector<64x256xf32>
    %39 = arith.subf %34, %38 : vector<64x256xf32>
    %40 = math.exp %39 : vector<64x256xf32>
    %cst_40 = arith.constant dense<0.000000e+00> : vector<256xf32>
    %41 = vector.multi_reduction <add>, %40, %cst_40 [0] : vector<64x256xf32> to vector<256xf32>
    %42 = vector.shape_cast %41 : vector<256xf32> to vector<1x256xf32>
    %43 = tpu.reciprocal %42 {approx = true} : vector<1x256xf32> -> vector<1x256xf32>
    %44 = vector.broadcast %43 : vector<1x256xf32> to vector<64x256xf32>
    %45 = arith.mulf %40, %44 : vector<64x256xf32>
    %46 = vector.extract_strided_slice %45 {offsets = [0, 0], sizes = [64, 128], strides = [1, 1]} : vector<64x256xf32> to vector<64x128xf32>
    %cst_41 = arith.constant dense<0.000000e+00> : vector<64xf32>
    %47 = vector.multi_reduction <add>, %46, %cst_41 [1] : vector<64x128xf32> to vector<64xf32>
    %48 = vector.shape_cast %47 : vector<64xf32> to vector<64x1xf32>
    %cst_42 = arith.constant 9.99999971E-10 : f32
    %49 = vector.broadcast %cst_42 : f32 to vector<64x1xf32>
    %50 = arith.addf %49, %48 : vector<64x1xf32>
    %51 = tpu.reciprocal %50 {approx = true} : vector<64x1xf32> -> vector<64x1xf32>
    %52 = vector.broadcast %51 : vector<64x1xf32> to vector<64x128xf32>
    %53 = arith.mulf %46, %52 : vector<64x128xf32>
    %54 = vector.extract_strided_slice %45 {offsets = [0, 128], sizes = [64, 128], strides = [1, 1]} : vector<64x256xf32> to vector<64x128xf32>
    %cst_43 = arith.constant dense<0.000000e+00> : vector<64xf32>
    %55 = vector.multi_reduction <add>, %54, %cst_43 [1] : vector<64x128xf32> to vector<64xf32>
    %56 = vector.shape_cast %55 : vector<64xf32> to vector<64x1xf32>
    %cst_44 = arith.constant 9.99999971E-10 : f32
    %57 = vector.broadcast %cst_44 : f32 to vector<64x1xf32>
    %58 = arith.addf %57, %56 : vector<64x1xf32>
    %59 = tpu.reciprocal %58 {approx = true} : vector<64x1xf32> -> vector<64x1xf32>
    %60 = vector.broadcast %59 : vector<64x1xf32> to vector<64x128xf32>
    %61 = arith.mulf %54, %60 : vector<64x128xf32>
    %62 = tpu.concatenate %53, %61 in 1 : vector<64x128xf32>, vector<64x128xf32> -> vector<64x256xf32>
    %cst_45 = arith.constant dense<0.000000e+00> : vector<32x256xf32>
    %63 = tpu.matmul %28, %62, %cst_45 {dimension_numbers = #tpu.dot_dimension_numbers<[1], [0], [0], [1], [0, 0, 1, 1], [], []>} : vector<32x64xf32>, vector<64x256xf32>, vector<32x256xf32> -> vector<32x256xf32>
    %64 = arith.subf %63, %35 : vector<32x256xf32>
    %65 = vector.broadcast %29 : vector<32x1xf32> to vector<32x256xf32>
    %66 = arith.addf %64, %65 : vector<32x256xf32>
    %cst_46 = arith.constant 0.000000e+00 : f32
    %67 = vector.broadcast %cst_46 : f32 to vector<32x256xf32>
    %68 = arith.maximumf %66, %67 : vector<32x256xf32>
    %69 = arith.addf %32, %68 : vector<32x256xf32>
    %70 = vector.extract_strided_slice %69 {offsets = [0, 0], sizes = [32, 128], strides = [1, 1]} : vector<32x256xf32> to vector<32x128xf32>
    %c0_47 = arith.constant 0 : index
    %c32 = arith.constant 32 : index
    %c0_48 = arith.constant 0 : index
    %71 = vector.load %arg6[%c0_47, %c32, %c0_48] : memref<2x96x256xf32, #tpu.memory_space<vmem>>, vector<1x32x128xf32>
    %72 = vector.shape_cast %71 : vector<1x32x128xf32> to vector<32x128xf32>
    %73 = vector.shape_cast %70 : vector<32x128xf32> to vector<1x32x128xf32>
    tpu.vector_store %arg6[%c0_47, %c32, %c0_48], %73 {strides = array<i32>} : memref<2x96x256xf32, #tpu.memory_space<vmem>>, vector<1x32x128xf32>,
    %c0_49 = arith.constant 0 : index
    %c128_50 = arith.constant 128 : index
    %74 = vector.load %arg7[%c0_49, %c128_50] : memref<32x512xf32, #tpu.memory_space<vmem>>, vector<32x128xf32>
    %c0_51 = arith.constant 0 : index
    %c32_52 = arith.constant 32 : index
    %c128_53 = arith.constant 128 : index
    %75 = vector.load %arg6[%c0_51, %c32_52, %c128_53] : memref<2x96x256xf32, #tpu.memory_space<vmem>>, vector<1x32x128xf32>
    %76 = vector.shape_cast %75 : vector<1x32x128xf32> to vector<32x128xf32>
    %77 = vector.shape_cast %74 : vector<32x128xf32> to vector<1x32x128xf32>
    tpu.vector_store %arg6[%c0_51, %c32_52, %c128_53], %77 {strides = array<i32>} : memref<2x96x256xf32, #tpu.memory_space<vmem>>, vector<1x32x128xf32>,
    %78 = vector.extract_strided_slice %69 {offsets = [0, 0], sizes = [32, 128], strides = [1, 1]} : vector<32x256xf32> to vector<32x128xf32>
    %c0_54 = arith.constant 0 : index
    %c0_55 = arith.constant 0 : index
    %79 = vector.load %arg7[%c0_54, %c0_55] : memref<32x512xf32, #tpu.memory_space<vmem>>, vector<32x128xf32>
    tpu.vector_store %arg7[%c0_54, %c0_55], %78 {strides = array<i32>} : memref<32x512xf32, #tpu.memory_space<vmem>>, vector<32x128xf32>,
    %80 = vector.extract_strided_slice %69 {offsets = [0, 128], sizes = [32, 128], strides = [1, 1]} : vector<32x256xf32> to vector<32x128xf32>
    %c1_56 = arith.constant 1 : index
    %c32_57 = arith.constant 32 : index
    %c0_58 = arith.constant 0 : index
    %81 = vector.load %arg6[%c1_56, %c32_57, %c0_58] : memref<2x96x256xf32, #tpu.memory_space<vmem>>, vector<1x32x128xf32>
    %82 = vector.shape_cast %81 : vector<1x32x128xf32> to vector<32x128xf32>
    %83 = vector.shape_cast %80 : vector<32x128xf32> to vector<1x32x128xf32>
    tpu.vector_store %arg6[%c1_56, %c32_57, %c0_58], %83 {strides = array<i32>} : memref<2x96x256xf32, #tpu.memory_space<vmem>>, vector<1x32x128xf32>,
    %c0_59 = arith.constant 0 : index
    %c384_60 = arith.constant 384 : index
    %84 = vector.load %arg7[%c0_59, %c384_60] : memref<32x512xf32, #tpu.memory_space<vmem>>, vector<32x128xf32>
    %c1_61 = arith.constant 1 : index
    %c32_62 = arith.constant 32 : index
    %c128_63 = arith.constant 128 : index
    %85 = vector.load %arg6[%c1_61, %c32_62, %c128_63] : memref<2x96x256xf32, #tpu.memory_space<vmem>>, vector<1x32x128xf32>
    %86 = vector.shape_cast %85 : vector<1x32x128xf32> to vector<32x128xf32>
    %87 = vector.shape_cast %84 : vector<32x128xf32> to vector<1x32x128xf32>
    tpu.vector_store %arg6[%c1_61, %c32_62, %c128_63], %87 {strides = array<i32>} : memref<2x96x256xf32, #tpu.memory_space<vmem>>, vector<1x32x128xf32>,
    %88 = vector.extract_strided_slice %69 {offsets = [0, 128], sizes = [32, 128], strides = [1, 1]} : vector<32x256xf32> to vector<32x128xf32>
    %c0_64 = arith.constant 0 : index
    %c256_65 = arith.constant 256 : index
    %89 = vector.load %arg7[%c0_64, %c256_65] : memref<32x512xf32, #tpu.memory_space<vmem>>, vector<32x128xf32>
    tpu.vector_store %arg7[%c0_64, %c256_65], %88 {strides = array<i32>} : memref<32x512xf32, #tpu.memory_space<vmem>>, vector<32x128xf32>,
    %c0_66 = arith.constant 0 : index
    %c0_67 = arith.constant 0 : index
    %90 = vector.load %arg7[%c0_66, %c0_67] : memref<32x512xf32, #tpu.memory_space<vmem>>, vector<32x512xf32>
    %c96 = arith.constant 96 : index
    %c0_68 = arith.constant 0 : index
    %91 = vector.load %arg3[%c96, %c0_68] : memref<160x32xf32, #tpu.memory_space<vmem>>, vector<64x32xf32>
    %c32_69 = arith.constant 32 : index
    %c0_70 = arith.constant 0 : index
    %92 = vector.load %arg4[%c32_69, %c0_70] : memref<64x64xf32, #tpu.memory_space<vmem>>, vector<32x32xf32>
    %c0_71 = arith.constant 0 : index
    %c2 = arith.constant 2 : index
    %93 = vector.load %arg5[%c0_71, %c2] : memref<32x4xf32, #tpu.memory_space<vmem>>, vector<32x1xf32>
    %c0_72 = arith.constant 0 : index
    %c3 = arith.constant 3 : index
    %94 = vector.load %arg5[%c0_72, %c3] : memref<32x4xf32, #tpu.memory_space<vmem>>, vector<32x1xf32>
    %95 = vector.broadcast %94 : vector<32x1xf32> to vector<32x512xf32>
    %96 = arith.addf %90, %95 : vector<32x512xf32>
    %cst_73 = arith.constant dense<0.000000e+00> : vector<64x512xf32>
    %97 = tpu.matmul %91, %96, %cst_73 {dimension_numbers = #tpu.dot_dimension_numbers<[1], [0], [0], [1], [0, 0, 1, 1], [], []>} : vector<64x32xf32>, vector<32x512xf32>, vector<64x512xf32> -> vector<64x512xf32>
    %98 = vector.extract_strided_slice %97 {offsets = [0, 0], sizes = [32, 512], strides = [1, 1]} : vector<64x512xf32> to vector<32x512xf32>
    %99 = vector.extract_strided_slice %97 {offsets = [32, 0], sizes = [32, 512], strides = [1, 1]} : vector<64x512xf32> to vector<32x512xf32>
    %cst_74 = arith.constant dense<0xFF800000> : vector<512xf32>
    %100 = vector.multi_reduction <maximumf>, %98, %cst_74 [0] : vector<32x512xf32> to vector<512xf32>
    %101 = vector.shape_cast %100 : vector<512xf32> to vector<1x512xf32>
    %102 = vector.broadcast %101 : vector<1x512xf32> to vector<32x512xf32>
    %103 = arith.subf %98, %102 : vector<32x512xf32>
    %104 = math.exp %103 : vector<32x512xf32>
    %cst_75 = arith.constant dense<0.000000e+00> : vector<512xf32>
    %105 = vector.multi_reduction <add>, %104, %cst_75 [0] : vector<32x512xf32> to vector<512xf32>
    %106 = vector.shape_cast %105 : vector<512xf32> to vector<1x512xf32>
    %107 = tpu.reciprocal %106 {approx = true} : vector<1x512xf32> -> vector<1x512xf32>
    %108 = vector.broadcast %107 : vector<1x512xf32> to vector<32x512xf32>
    %109 = arith.mulf %104, %108 : vector<32x512xf32>
    %110 = vector.extract_strided_slice %109 {offsets = [0, 0], sizes = [32, 256], strides = [1, 1]} : vector<32x512xf32> to vector<32x256xf32>
    %cst_76 = arith.constant dense<0.000000e+00> : vector<32xf32>
    %111 = vector.multi_reduction <add>, %110, %cst_76 [1] : vector<32x256xf32> to vector<32xf32>
    %112 = vector.shape_cast %111 : vector<32xf32> to vector<32x1xf32>
    %cst_77 = arith.constant 9.99999971E-10 : f32
    %113 = vector.broadcast %cst_77 : f32 to vector<32x1xf32>
    %114 = arith.addf %113, %112 : vector<32x1xf32>
    %115 = tpu.reciprocal %114 {approx = true} : vector<32x1xf32> -> vector<32x1xf32>
    %116 = vector.broadcast %115 : vector<32x1xf32> to vector<32x256xf32>
    %117 = arith.mulf %110, %116 : vector<32x256xf32>
    %118 = vector.extract_strided_slice %109 {offsets = [0, 256], sizes = [32, 256], strides = [1, 1]} : vector<32x512xf32> to vector<32x256xf32>
    %cst_78 = arith.constant dense<0.000000e+00> : vector<32xf32>
    %119 = vector.multi_reduction <add>, %118, %cst_78 [1] : vector<32x256xf32> to vector<32xf32>
    %120 = vector.shape_cast %119 : vector<32xf32> to vector<32x1xf32>
    %cst_79 = arith.constant 9.99999971E-10 : f32
    %121 = vector.broadcast %cst_79 : f32 to vector<32x1xf32>
    %122 = arith.addf %121, %120 : vector<32x1xf32>
    %123 = tpu.reciprocal %122 {approx = true} : vector<32x1xf32> -> vector<32x1xf32>
    %124 = vector.broadcast %123 : vector<32x1xf32> to vector<32x256xf32>
    %125 = arith.mulf %118, %124 : vector<32x256xf32>
    %126 = tpu.concatenate %117, %125 in 1 : vector<32x256xf32>, vector<32x256xf32> -> vector<32x512xf32>
    %cst_80 = arith.constant dense<0.000000e+00> : vector<32x512xf32>
    %127 = tpu.matmul %92, %126, %cst_80 {dimension_numbers = #tpu.dot_dimension_numbers<[1], [0], [0], [1], [0, 0, 1, 1], [], []>} : vector<32x32xf32>, vector<32x512xf32>, vector<32x512xf32> -> vector<32x512xf32>
    %128 = arith.subf %127, %99 : vector<32x512xf32>
    %129 = vector.broadcast %93 : vector<32x1xf32> to vector<32x512xf32>
    %130 = arith.addf %128, %129 : vector<32x512xf32>
    %cst_81 = arith.constant 0.000000e+00 : f32
    %131 = vector.broadcast %cst_81 : f32 to vector<32x512xf32>
    %132 = arith.maximumf %130, %131 : vector<32x512xf32>
    %133 = arith.addf %96, %132 : vector<32x512xf32>
    %134 = vector.extract_strided_slice %133 {offsets = [0, 0], sizes = [32, 256], strides = [1, 1]} : vector<32x512xf32> to vector<32x256xf32>
    %c0_82 = arith.constant 0 : index
    %c64 = arith.constant 64 : index
    %c0_83 = arith.constant 0 : index
    %135 = vector.load %arg6[%c0_82, %c64, %c0_83] : memref<2x96x256xf32, #tpu.memory_space<vmem>>, vector<1x32x256xf32>
    %136 = vector.shape_cast %135 : vector<1x32x256xf32> to vector<32x256xf32>
    %137 = vector.shape_cast %134 : vector<32x256xf32> to vector<1x32x256xf32>
    tpu.vector_store %arg6[%c0_82, %c64, %c0_83], %137 {strides = array<i32>} : memref<2x96x256xf32, #tpu.memory_space<vmem>>, vector<1x32x256xf32>,
    %138 = vector.extract_strided_slice %133 {offsets = [0, 256], sizes = [32, 256], strides = [1, 1]} : vector<32x512xf32> to vector<32x256xf32>
    %c1_84 = arith.constant 1 : index
    %c64_85 = arith.constant 64 : index
    %c0_86 = arith.constant 0 : index
    %139 = vector.load %arg6[%c1_84, %c64_85, %c0_86] : memref<2x96x256xf32, #tpu.memory_space<vmem>>, vector<1x32x256xf32>
    %140 = vector.shape_cast %139 : vector<1x32x256xf32> to vector<32x256xf32>
    %141 = vector.shape_cast %138 : vector<32x256xf32> to vector<1x32x256xf32>
    tpu.vector_store %arg6[%c1_84, %c64_85, %c0_86], %141 {strides = array<i32>} : memref<2x96x256xf32, #tpu.memory_space<vmem>>, vector<1x32x256xf32>,
    return
  }
  func.func @transform_0(%arg0: i32) -> (i32, i32, i32) {
    %c0_i32 = arith.constant 0 : i32
    %c0_i32_0 = arith.constant 0 : i32
    %c0_i32_1 = arith.constant 0 : i32
    %c0_i32_2 = arith.constant 0 : i32
    return %c0_i32, %c0_i32_0, %c0_i32_1 : i32, i32, i32
  }
  func.func @transform_1(%arg0: i32) -> (i32, i32, i32) {
    %c0_i32 = arith.constant 0 : i32
    %c0_i32_0 = arith.constant 0 : i32
    %c0_i32_1 = arith.constant 0 : i32
    %c0_i32_2 = arith.constant 0 : i32
    return %c0_i32, %c0_i32_0, %c0_i32_1 : i32, i32, i32
  }
  func.func @transform_2(%arg0: i32) -> (i32, i32) {
    %c0_i32 = arith.constant 0 : i32
    %c0_i32_0 = arith.constant 0 : i32
    %c0_i32_1 = arith.constant 0 : i32
    return %c0_i32, %c0_i32_0 : i32, i32
  }
  func.func @transform_3(%arg0: i32) -> (i32, i32) {
    %c0_i32 = arith.constant 0 : i32
    %c0_i32_0 = arith.constant 0 : i32
    %c0_i32_1 = arith.constant 0 : i32
    return %c0_i32, %c0_i32_0 : i32, i32
  }
  func.func @transform_4(%arg0: i32) -> (i32, i32) {
    %c0_i32 = arith.constant 0 : i32
    %c0_i32_0 = arith.constant 0 : i32
    %c0_i32_1 = arith.constant 0 : i32
    return %c0_i32, %c0_i32_0 : i32, i32
  }
  func.func @transform_5(%arg0: i32) -> (i32, i32, i32) {
    %c0_i32 = arith.constant 0 : i32
    %c0_i32_0 = arith.constant 0 : i32
    %c0_i32_1 = arith.constant 0 : i32
    %c0_i32_2 = arith.constant 0 : i32
    return %c0_i32, %c0_i32_0, %c0_i32_1 : i32, i32, i32
  }
}

</mosaic_0001>

<llo_original>
// kernel: tpu_custom_call.1
$region0: #{tpu_custom_call.1}
  #allocation0 [shape = 'u32[]', space=smem, size = 0x4, offset = 0x4, fixed_abs, tag = 'smem constant byte address 0x4 - core index']
  #allocation1 [shape = 'u32[144,128]{1,0:T(1,128)}', space=vmem, size = 0x12000, scoped, tag = 'internal scratch']
  #allocation2 [shape = 'f32[32,512]{1,0:T(8,128)}', space=vmem, size = 0x10000, scoped, tag = 'scratch operand']
  %s0 = inlined_call_operand.vmem [shape: f32[2,32,128], index: 0, kind: input, shape index: {}]
  %s1 = inlined_call_operand.vmem [shape: f32[2,32,128], index: 1, kind: input, shape index: {}]
  %s2 = inlined_call_operand.vmem [shape: f32[160,32], index: 2, kind: input, shape index: {}]
  %s3 = inlined_call_operand.vmem [shape: f32[64,64], index: 3, kind: input, shape index: {}]
  %s4 = inlined_call_operand.vmem [shape: f32[32,4], index: 4, kind: input, shape index: {}]
  %s5 = inlined_call_operand.hbm [shape: f32[2,96,256], index: 5, kind: output, shape index: {}]
  %s6 = sld [smem:[#allocation0]]
  $region30: #{tpu_custom_call.1} parent=0
    _
  %s8 = ssub.s32 1, %s6
  %s9 = scalar_select 0, %s8, %s6
  $region1: #{tpu_custom_call.1} parent=0
    #allocation3 [shape = 'u8[196608]{0}', space=vmem, size = 0x30000, scoped, tag = 'output window, operand 0, single buffered']
    #allocation4 [shape = 's32[1]{0}', space=sflag, size = 0x4, scoped, tag = 'scoped memory for tpu_custom_call.1']
    %10 = vsyncpa [#allocation4], 0
    // Predicated region
    $region2: #{tpu_custom_call.1} parent=1 // pred_check
      _
    $region3: #{tpu_custom_call.1} parent=1 // pred_check_branch
      %12 = sbr.rel (0) target = $region5
    $region4: #{tpu_custom_call.1} parent=1 // pred_region
      _
    $region5: #{tpu_custom_call.1} parent=1 // pred_fallthru
      _
    // Predicated region
    $region6: #{tpu_custom_call.1} parent=1 // pred_check
      _
    $region7: #{tpu_custom_call.1} parent=1 // pred_check_branch
      %14 = sbr.rel (0) target = $region9
    $region8: #{tpu_custom_call.1} parent=1 // pred_region
      _
    $region9: #{tpu_custom_call.1} parent=1 // pred_fallthru
      _
    // Predicated region
    $region10: #{tpu_custom_call.1} parent=1 // pred_check
      _
    $region11: #{tpu_custom_call.1} parent=1 // pred_check_branch
      %16 = sbr.rel (0) target = $region13
    $region12: #{tpu_custom_call.1} parent=1 // pred_region
      _
    $region13: #{tpu_custom_call.1} parent=1 // pred_fallthru
      _
    // Predicated region
    $region14: #{tpu_custom_call.1} parent=1 // pred_check
      _
    $region15: #{tpu_custom_call.1} parent=1 // pred_check_branch
      %18 = sbr.rel (0) target = $region17
    $region16: #{tpu_custom_call.1} parent=1 // pred_region
      _
    $region17: #{tpu_custom_call.1} parent=1 // pred_fallthru
      _
    // Predicated region
    $region18: #{tpu_custom_call.1} parent=1 // pred_check
      _
    $region19: #{tpu_custom_call.1} parent=1 // pred_check_branch
      %20 = sbr.rel (0) target = $region21
    $region20: #{tpu_custom_call.1} parent=1 // pred_region
      _
    $region21: #{tpu_custom_call.1} parent=1 // pred_fallthru
      _
    %v21 = vld [vmem:[%s0] sm:$0xff]
    %v22 = vld [vmem:[%s0 + $0x8] sm:$0xff]
    %v23 = vld [vmem:[%s0 + $0x10] sm:$0xff]
    %v24 = vld [vmem:[%s0 + $0x18] sm:$0xff]
    %25 = vst [vmem:[#allocation2] sm:$0xff] %v21
    %26 = vst [vmem:[#allocation2 + $0x20] sm:$0xff] %v22
    %27 = vst [vmem:[#allocation2 + $0x40] sm:$0xff] %v23
    %28 = vst [vmem:[#allocation2 + $0x60] sm:$0xff] %v24
    %29 = vst [vmem:[#allocation3] sm:$0xff] %v21
    %30 = vst [vmem:[#allocation3 + $0x10] sm:$0xff] %v22
    %31 = vst [vmem:[#allocation3 + $0x20] sm:$0xff] %v23
    %32 = vst [vmem:[#allocation3 + $0x30] sm:$0xff] %v24
    %v33 = vld [vmem:[%s1] sm:$0xff]
    %v34 = vld [vmem:[%s1 + $0x8] sm:$0xff]
    %v35 = vld [vmem:[%s1 + $0x10] sm:$0xff]
    %v36 = vld [vmem:[%s1 + $0x18] sm:$0xff]
    %37 = vst [vmem:[#allocation2 + $0x8] sm:$0xff] %v33
    %38 = vst [vmem:[#allocation2 + $0x28] sm:$0xff] %v34
    %39 = vst [vmem:[#allocation2 + $0x48] sm:$0xff] %v35
    %40 = vst [vmem:[#allocation2 + $0x68] sm:$0xff] %v36
    %41 = vst [vmem:[#allocation3 + $0x8] sm:$0xff] %v33
    %42 = vst [vmem:[#allocation3 + $0x18] sm:$0xff] %v34
    %43 = vst [vmem:[#allocation3 + $0x28] sm:$0xff] %v35
    %44 = vst [vmem:[#allocation3 + $0x38] sm:$0xff] %v36
    %s45 = scalar_lea.vmem %s0, 32
    %v46 = vld [vmem:[%s45] sm:$0xff]
    %v47 = vld [vmem:[%s45 + $0x8] sm:$0xff]
    %v48 = vld [vmem:[%s45 + $0x10] sm:$0xff]
    %v49 = vld [vmem:[%s45 + $0x18] sm:$0xff]
    %50 = vst [vmem:[#allocation2 + $0x10] sm:$0xff] %v46
    %51 = vst [vmem:[#allocation2 + $0x30] sm:$0xff] %v47
    %52 = vst [vmem:[#allocation2 + $0x50] sm:$0xff] %v48
    %53 = vst [vmem:[#allocation2 + $0x70] sm:$0xff] %v49
    %s54 = scalar_lea.vmem [#allocation3], 192
    %55 = vst [vmem:[%s54] sm:$0xff] %v46
    %56 = vst [vmem:[%s54 + $0x10] sm:$0xff] %v47
    %57 = vst [vmem:[%s54 + $0x20] sm:$0xff] %v48
    %58 = vst [vmem:[%s54 + $0x30] sm:$0xff] %v49
    %s59 = scalar_lea.vmem %s1, 32
    %v60 = vld [vmem:[%s59] sm:$0xff]
    %v61 = vld [vmem:[%s59 + $0x8] sm:$0xff]
    %v62 = vld [vmem:[%s59 + $0x10] sm:$0xff]
    %v63 = vld [vmem:[%s59 + $0x18] sm:$0xff]
    %64 = vst [vmem:[#allocation2 + $0x18] sm:$0xff] %v60
    %65 = vst [vmem:[#allocation2 + $0x38] sm:$0xff] %v61
    %66 = vst [vmem:[#allocation2 + $0x58] sm:$0xff] %v62
    %67 = vst [vmem:[#allocation2 + $0x78] sm:$0xff] %v63
    %68 = vst [vmem:[%s54 + $0x8] sm:$0xff] %v60
    %69 = vst [vmem:[%s54 + $0x18] sm:$0xff] %v61
    %70 = vst [vmem:[%s54 + $0x28] sm:$0xff] %v62
    %71 = vst [vmem:[%s54 + $0x38] sm:$0xff] %v63
    %v72 = vld [vmem:[#allocation2] sm:$0xff]
    %v73 = vld [vmem:[#allocation2 + $0x20] sm:$0xff]
    %v74 = vld [vmem:[#allocation2 + $0x40] sm:$0xff]
    %v75 = vld [vmem:[#allocation2 + $0x60] sm:$0xff]
    %v76 = vld [vmem:[#allocation2 + $0x10] sm:$0xff]
    %v77 = vld [vmem:[#allocation2 + $0x30] sm:$0xff]
    %v78 = vld [vmem:[#allocation2 + $0x50] sm:$0xff]
    %v79 = vld [vmem:[#allocation2 + $0x70] sm:$0xff]
    %v80 = vld [vmem:[%s2] sm:$0xff]
    %v81 = vld [vmem:[%s2 + $0x8] sm:$0xff]
    %v82 = vld [vmem:[%s2 + $0x10] sm:$0xff]
    %v83 = vld [vmem:[%s2 + $0x18] sm:$0xff]
    %v84 = vld [vmem:[%s2 + $0x20] sm:$0xff]
    %v85 = vld [vmem:[%s2 + $0x28] sm:$0xff]
    %v86 = vld [vmem:[%s2 + $0x30] sm:$0xff]
    %v87 = vld [vmem:[%s2 + $0x38] sm:$0xff]
    %v88 = vld [vmem:[%s2 + $0x40] sm:$0xff]
    %v89 = vld [vmem:[%s2 + $0x48] sm:$0xff]
    %v90 = vld [vmem:[%s2 + $0x50] sm:$0xff]
    %v91 = vld [vmem:[%s2 + $0x58] sm:$0xff]
    %v92 = vld [vmem:[%s3] sm:$0xff]
    %v93 = vld [vmem:[%s3 + $0x8] sm:$0xff]
    %v94 = vld [vmem:[%s3 + $0x10] sm:$0xff]
    %v95 = vld [vmem:[%s3 + $0x18] sm:$0xff]
    %v96 = vld [vmem:[%s4] sm:$0xff]
    %v97 = vld [vmem:[%s4 + $0x8] sm:$0xff]
    %v98 = vld [vmem:[%s4 + $0x10] sm:$0xff]
    %v99 = vld [vmem:[%s4 + $0x18] sm:$0xff]
    %101 = vset.pattern.permute.xlu0 1
    %102 = vperm.xlu0 %101, %v96
    %v103 = vpop.permute.xlu0 %102
    %106 = vset.pattern.permute.xlu0 1
    %107 = vperm.xlu0 %106, %v97
    %v108 = vpop.permute.xlu0 %107
    %111 = vset.pattern.permute.xlu0 1
    %112 = vperm.xlu0 %111, %v98
    %v113 = vpop.permute.xlu0 %112
    %116 = vset.pattern.permute.xlu0 1
    %117 = vperm.xlu0 %116, %v99
    %v118 = vpop.permute.xlu0 %117
    %v120 = vadd.f32 %v72, %v103
    %v121 = vadd.f32 %v76, %v103
    %v122 = vadd.f32 %v73, %v108
    %v123 = vadd.f32 %v77, %v108
    %v124 = vadd.f32 %v74, %v113
    %v125 = vadd.f32 %v78, %v113
    %v126 = vadd.f32 %v75, %v118
    %v127 = vadd.f32 %v79, %v118
    %vm128 = vcmask 261120
    %v130 = vsel %vm128, %v80, 0
    %v133 = vsel %vm128, %v81, 0
    %v136 = vsel %vm128, %v82, 0
    %v139 = vsel %vm128, %v83, 0
    %v142 = vsel %vm128, %v84, 0
    %v145 = vsel %vm128, %v85, 0
    %v148 = vsel %vm128, %v86, 0
    %v151 = vsel %vm128, %v87, 0
    %v154 = vsel %vm128, %v88, 0
    %v157 = vsel %vm128, %v89, 0
    %v160 = vsel %vm128, %v90, 0
    %v163 = vsel %vm128, %v91, 0
    %165 = vmatprep.subr.mxu0 %v121
    %166 = vmatpush1.msra.mxu0 %v120
    %167 = vmatprep.subr.mxu0 %v123
    %168 = vmatpush1.msra.mxu0 %v122
    %169 = vmatprep.subr.mxu0 %v125
    %170 = vmatpush1.msra.mxu0 %v124
    %171 = vmatprep.subr.mxu0 %v127
    %172 = vmatpush1.msra.mxu0 %v126
    %173 = vmatprep.subr.mxu0 0.0
    %174 = vmatpush1.msra.mxu0 0.0
    %175 = vmatprep.subr.mxu0 0.0
    %176 = vmatpush1.msra.mxu0 0.0
    %177 = vmatprep.subr.mxu0 0.0
    %178 = vmatpush1.msra.mxu0 0.0
    %179 = vmatprep.subr.mxu0 0.0
    %180 = vmatpush1.msra.mxu0 0.0
    %181 = vmatprep.subr.mxu0 0.0
    %182 = vmatpush1.msra.mxu0 0.0
    %183 = vmatprep.subr.mxu0 0.0
    %184 = vmatpush1.msra.mxu0 0.0
    %185 = vmatprep.subr.mxu0 0.0
    %186 = vmatpush1.msra.mxu0 0.0
    %187 = vmatprep.subr.mxu0 0.0
    %188 = vmatpush1.msra.mxu0 0.0
    %189 = vmatprep.subr.mxu0 0.0
    %190 = vmatpush1.msra.mxu0 0.0
    %191 = vmatprep.subr.mxu0 0.0
    %192 = vmatpush1.msra.mxu0 0.0
    %193 = vmatprep.subr.mxu0 0.0
    %194 = vmatpush1.msra.mxu0 0.0
    %195 = vmatprep.subr.mxu0 0.0
    %196 = vmatpush1.msra.mxu0 0.0
    %197 = vmatprep.subr.mxu0 0.0
    %198 = vmatpush1.msra.mxu0 0.0
    %199 = vmatprep.subr.mxu0 0.0
    %200 = vmatpush1.msra.mxu0 0.0
    %201 = vmatprep.subr.mxu0 0.0
    %202 = vmatpush1.msra.mxu0 0.0
    %203 = vmatprep.subr.mxu0 0.0
    %204 = vmatpush1.msra.mxu0 0.0
    %205 = vmatprep.subr.mxu0 0.0
    %206 = vmatpush1.msra.mxu0 0.0
    %207 = vmatprep.subr.mxu0 0.0
    %208 = vmatpush1.msra.mxu0 0.0
    %209 = vmatprep.subr.mxu0 0.0
    %210 = vmatpush1.msra.mxu0 0.0
    %211 = vmatprep.subr.mxu0 0.0
    %212 = vmatpush1.msra.mxu0 0.0
    %213 = vmatprep.subr.mxu0 0.0
    %214 = vmatpush1.msra.mxu0 0.0
    %215 = vmatprep.subr.mxu0 0.0
    %216 = vmatpush1.msra.mxu0 0.0
    %217 = vmatprep.subr.mxu0 0.0
    %218 = vmatpush1.msra.mxu0 0.0
    %219 = vmatprep.subr.mxu0 0.0
    %220 = vmatpush1.msra.mxu0 0.0
    %221 = vmatprep.subr.mxu0 0.0
    %222 = vmatpush1.msra.mxu0 0.0
    %223 = vmatprep.subr.mxu0 0.0
    %224 = vmatpush1.msra.mxu0 0.0
    %225 = vmatprep.subr.mxu0 0.0
    %226 = vmatpush1.msra.mxu0 0.0
    %227 = vmatprep.subr.mxu0 0.0
    %228 = vmatpush1.msra.mxu0 0.0
    %229 = vmatprep.mubr.f32.mxu0 0.0
    %230 = vmatmul.mubr.f32.gmra.mrb[0].mxu0 %v130
    %v231 = vpop.f32.mrb[0].mxu0
    %v232 = vadd.f32 0.0, %v231
    %v233 = vpop.f32.mrb[0].mxu0
    %v234 = vadd.f32 0.0, %v233
    %235 = vmatprep.mubr.f32.mxu0 0.0
    %236 = vmatmul.mubr.f32.gmra.mrb[0].mxu0 %v133
    %v237 = vpop.f32.mrb[0].mxu0
    %v238 = vadd.f32 0.0, %v237
    %v239 = vpop.f32.mrb[0].mxu0
    %v240 = vadd.f32 0.0, %v239
    %241 = vmatprep.mubr.f32.mxu0 0.0
    %242 = vmatmul.mubr.f32.gmra.mrb[0].mxu0 %v136
    %v243 = vpop.f32.mrb[0].mxu0
    %v244 = vadd.f32 0.0, %v243
    %v245 = vpop.f32.mrb[0].mxu0
    %v246 = vadd.f32 0.0, %v245
    %247 = vmatprep.mubr.f32.mxu0 0.0
    %248 = vmatmul.mubr.f32.gmra.mrb[0].mxu0 %v139
    %v249 = vpop.f32.mrb[0].mxu0
    %v250 = vadd.f32 0.0, %v249
    %v251 = vpop.f32.mrb[0].mxu0
    %v252 = vadd.f32 0.0, %v251
    %253 = vmatprep.mubr.f32.mxu0 0.0
    %254 = vmatmul.mubr.f32.gmra.mrb[0].mxu0 %v142
    %v255 = vpop.f32.mrb[0].mxu0
    %v256 = vadd.f32 0.0, %v255
    %v257 = vpop.f32.mrb[0].mxu0
    %v258 = vadd.f32 0.0, %v257
    %259 = vmatprep.mubr.f32.mxu0 0.0
    %260 = vmatmul.mubr.f32.gmra.mrb[0].mxu0 %v145
    %v261 = vpop.f32.mrb[0].mxu0
    %v262 = vadd.f32 0.0, %v261
    %v263 = vpop.f32.mrb[0].mxu0
    %v264 = vadd.f32 0.0, %v263
    %265 = vmatprep.mubr.f32.mxu0 0.0
    %266 = vmatmul.mubr.f32.gmra.mrb[0].mxu0 %v148
    %v267 = vpop.f32.mrb[0].mxu0
    %v268 = vadd.f32 0.0, %v267
    %v269 = vpop.f32.mrb[0].mxu0
    %v270 = vadd.f32 0.0, %v269
    %271 = vmatprep.mubr.f32.mxu0 0.0
    %272 = vmatmul.mubr.f32.gmra.mrb[0].mxu0 %v151
    %v273 = vpop.f32.mrb[0].mxu0
    %v274 = vadd.f32 0.0, %v273
    %v275 = vpop.f32.mrb[0].mxu0
    %v276 = vadd.f32 0.0, %v275
    %277 = vmatprep.mubr.f32.mxu0 0.0
    %278 = vmatmul.mubr.f32.gmra.mrb[0].mxu0 %v154
    %v279 = vpop.f32.mrb[0].mxu0
    %v280 = vadd.f32 0.0, %v279
    %v281 = vpop.f32.mrb[0].mxu0
    %v282 = vadd.f32 0.0, %v281
    %283 = vmatprep.mubr.f32.mxu0 0.0
    %284 = vmatmul.mubr.f32.gmra.mrb[0].mxu0 %v157
    %v285 = vpop.f32.mrb[0].mxu0
    %v286 = vadd.f32 0.0, %v285
    %v287 = vpop.f32.mrb[0].mxu0
    %v288 = vadd.f32 0.0, %v287
    %289 = vmatprep.mubr.f32.mxu0 0.0
    %290 = vmatmul.mubr.f32.gmra.mrb[0].mxu0 %v160
    %v291 = vpop.f32.mrb[0].mxu0
    %v292 = vadd.f32 0.0, %v291
    %v293 = vpop.f32.mrb[0].mxu0
    %v294 = vadd.f32 0.0, %v293
    %295 = vmatprep.mubr.f32.mxu0 0.0
    %296 = vmatmul.mubr.f32.gmra.mrb[0].mxu0 %v163
    %v297 = vpop.f32.mrb[0].mxu0
    %v298 = vadd.f32 0.0, %v297
    %v299 = vpop.f32.mrb[0].mxu0
    %v300 = vadd.f32 0.0, %v299
    %301 = vdwg.mxu0
    %v302 = vmax.f32 %v232, %v244
    %v303 = vmax.f32 %v238, %v250
    %v304 = vmax.f32 %v302, %v256
    %v305 = vmax.f32 %v303, %v262
    %v306 = vmax.f32 %v304, %v268
    %v307 = vmax.f32 %v305, %v274
    %v308 = vmax.f32 %v306, %v307
    %v309 = vrot.slane %v308, 4
    %v310 = vmax.f32 %v308, %v309
    %v311 = vrot.slane %v310, 2
    %v312 = vmax.f32 %v310, %v311
    %v313 = vrot.slane %v312, 1
    %v314 = vmax.f32 %v312, %v313
    %v315 = vmax.f32 %v234, %v246
    %v316 = vmax.f32 %v240, %v252
    %v317 = vmax.f32 %v315, %v258
    %v318 = vmax.f32 %v316, %v264
    %v319 = vmax.f32 %v317, %v270
    %v320 = vmax.f32 %v318, %v276
    %v321 = vmax.f32 %v319, %v320
    %v322 = vrot.slane %v321, 4
    %v323 = vmax.f32 %v321, %v322
    %v324 = vrot.slane %v323, 2
    %v325 = vmax.f32 %v323, %v324
    %v326 = vrot.slane %v325, 1
    %v327 = vmax.f32 %v325, %v326
    %v328 = vsub.f32 %v232, %v314
    %v329 = vsub.f32 %v234, %v327
    %v330 = vsub.f32 %v238, %v314
    %v331 = vsub.f32 %v240, %v327
    %v332 = vsub.f32 %v244, %v314
    %v333 = vsub.f32 %v246, %v327
    %v334 = vsub.f32 %v250, %v314
    %v335 = vsub.f32 %v252, %v327
    %v336 = vsub.f32 %v256, %v314
    %v337 = vsub.f32 %v258, %v327
    %v338 = vsub.f32 %v262, %v314
    %v339 = vsub.f32 %v264, %v327
    %v340 = vsub.f32 %v268, %v314
    %v341 = vsub.f32 %v270, %v327
    %v342 = vsub.f32 %v274, %v314
    %v343 = vsub.f32 %v276, %v327
    %v344 = vmul.f32 %v328, 1.442695
    %v345 = vpow.pop %v344
    %v346 = vmul.f32 %v329, 1.442695
    %v347 = vpow.pop %v346
    %v348 = vmul.f32 %v330, 1.442695
    %v349 = vpow.pop %v348
    %v350 = vmul.f32 %v331, 1.442695
    %v351 = vpow.pop %v350
    %v352 = vmul.f32 %v332, 1.442695
    %v353 = vpow.pop %v352
    %v354 = vmul.f32 %v333, 1.442695
    %v355 = vpow.pop %v354
    %v356 = vmul.f32 %v334, 1.442695
    %v357 = vpow.pop %v356
    %v358 = vmul.f32 %v335, 1.442695
    %v359 = vpow.pop %v358
    %v360 = vmul.f32 %v336, 1.442695
    %v361 = vpow.pop %v360
    %v362 = vmul.f32 %v337, 1.442695
    %v363 = vpow.pop %v362
    %v364 = vmul.f32 %v338, 1.442695
    %v365 = vpow.pop %v364
    %v366 = vmul.f32 %v339, 1.442695
    %v367 = vpow.pop %v366
    %v368 = vmul.f32 %v340, 1.442695
    %v369 = vpow.pop %v368
    %v370 = vmul.f32 %v341, 1.442695
    %v371 = vpow.pop %v370
    %v372 = vmul.f32 %v342, 1.442695
    %v373 = vpow.pop %v372
    %v374 = vmul.f32 %v343, 1.442695
    %v375 = vpow.pop %v374
    %v376 = vadd.f32 %v345, %v349
    %v377 = vadd.f32 %v376, %v353
    %v378 = vadd.f32 %v377, %v357
    %v379 = vadd.f32 %v378, %v361
    %v380 = vadd.f32 %v379, %v365
    %v381 = vadd.f32 %v380, %v369
    %v382 = vadd.f32 %v381, %v373
    %v383 = vrot.slane %v382, 4
    %v384 = vadd.f32 %v382, %v383
    %v385 = vrot.slane %v384, 2
    %v386 = vadd.f32 %v384, %v385
    %v387 = vrot.slane %v386, 1
    %v388 = vadd.f32 %v386, %v387
    %v389 = vadd.f32 %v347, %v351
    %v390 = vadd.f32 %v389, %v355
    %v391 = vadd.f32 %v390, %v359
    %v392 = vadd.f32 %v391, %v363
    %v393 = vadd.f32 %v392, %v367
    %v394 = vadd.f32 %v393, %v371
    %v395 = vadd.f32 %v394, %v375
    %v396 = vrot.slane %v395, 4
    %v397 = vadd.f32 %v395, %v396
    %v398 = vrot.slane %v397, 2
    %v399 = vadd.f32 %v397, %v398
    %v400 = vrot.slane %v399, 1
    %v401 = vadd.f32 %v399, %v400
    %v402 = vrcp.pop %v388
    %v403 = vrcp.pop %v401
    %v404 = vmul.f32 %v345, %v402
    %v405 = vmul.f32 %v347, %v403
    %v406 = vmul.f32 %v349, %v402
    %v407 = vmul.f32 %v351, %v403
    %v408 = vmul.f32 %v353, %v402
    %v409 = vmul.f32 %v355, %v403
    %v410 = vmul.f32 %v357, %v402
    %v411 = vmul.f32 %v359, %v403
    %v412 = vmul.f32 %v361, %v402
    %v413 = vmul.f32 %v363, %v403
    %v414 = vmul.f32 %v365, %v402
    %v415 = vmul.f32 %v367, %v403
    %v416 = vmul.f32 %v369, %v402
    %v417 = vmul.f32 %v371, %v403
    %v418 = vmul.f32 %v373, %v402
    %v419 = vmul.f32 %v375, %v403
    %420 = vadd.xlane.f32.xlu0 %v404
    %v421 = vpop.xlane.xlu0 %420
    %422 = vadd.xlane.f32.xlu0 %v406
    %v423 = vpop.xlane.xlu0 %422
    %424 = vadd.xlane.f32.xlu0 %v408
    %v425 = vpop.xlane.xlu0 %424
    %426 = vadd.xlane.f32.xlu0 %v410
    %v427 = vpop.xlane.xlu0 %426
    %428 = vadd.xlane.f32.xlu0 %v412
    %v429 = vpop.xlane.xlu0 %428
    %430 = vadd.xlane.f32.xlu0 %v414
    %v431 = vpop.xlane.xlu0 %430
    %432 = vadd.xlane.f32.xlu0 %v416
    %v433 = vpop.xlane.xlu0 %432
    %434 = vadd.xlane.f32.xlu0 %v418
    %v435 = vpop.xlane.xlu0 %434
    %v436 = vadd.f32 %v421, 1e-09
    %v437 = vadd.f32 %v423, 1e-09
    %v438 = vadd.f32 %v425, 1e-09
    %v439 = vadd.f32 %v427, 1e-09
    %v440 = vadd.f32 %v429, 1e-09
    %v441 = vadd.f32 %v431, 1e-09
    %v442 = vadd.f32 %v433, 1e-09
    %v443 = vadd.f32 %v435, 1e-09
    %v444 = vrcp.pop %v436
    %v445 = vrcp.pop %v437
    %v446 = vrcp.pop %v438
    %v447 = vrcp.pop %v439
    %v448 = vrcp.pop %v440
    %v449 = vrcp.pop %v441
    %v450 = vrcp.pop %v442
    %v451 = vrcp.pop %v443
    %v452 = vmul.f32 %v404, %v444
    %v453 = vmul.f32 %v406, %v445
    %v454 = vmul.f32 %v408, %v446
    %v455 = vmul.f32 %v410, %v447
    %v456 = vmul.f32 %v412, %v448
    %v457 = vmul.f32 %v414, %v449
    %v458 = vmul.f32 %v416, %v450
    %v459 = vmul.f32 %v418, %v451
    %460 = vadd.xlane.f32.xlu0 %v405
    %v461 = vpop.xlane.xlu0 %460
    %462 = vadd.xlane.f32.xlu0 %v407
    %v463 = vpop.xlane.xlu0 %462
    %464 = vadd.xlane.f32.xlu0 %v409
    %v465 = vpop.xlane.xlu0 %464
    %466 = vadd.xlane.f32.xlu0 %v411
    %v467 = vpop.xlane.xlu0 %466
    %468 = vadd.xlane.f32.xlu0 %v413
    %v469 = vpop.xlane.xlu0 %468
    %470 = vadd.xlane.f32.xlu0 %v415
    %v471 = vpop.xlane.xlu0 %470
    %472 = vadd.xlane.f32.xlu0 %v417
    %v473 = vpop.xlane.xlu0 %472
    %474 = vadd.xlane.f32.xlu0 %v419
    %v475 = vpop.xlane.xlu0 %474
    %v476 = vadd.f32 %v461, 1e-09
    %v477 = vadd.f32 %v463, 1e-09
    %v478 = vadd.f32 %v465, 1e-09
    %v479 = vadd.f32 %v467, 1e-09
    %v480 = vadd.f32 %v469, 1e-09
    %v481 = vadd.f32 %v471, 1e-09
    %v482 = vadd.f32 %v473, 1e-09
    %v483 = vadd.f32 %v475, 1e-09
    %v484 = vrcp.pop %v476
    %v485 = vrcp.pop %v477
    %v486 = vrcp.pop %v478
    %v487 = vrcp.pop %v479
    %v488 = vrcp.pop %v480
    %v489 = vrcp.pop %v481
    %v490 = vrcp.pop %v482
    %v491 = vrcp.pop %v483
    %v492 = vmul.f32 %v405, %v484
    %v493 = vmul.f32 %v407, %v485
    %v494 = vmul.f32 %v409, %v486
    %v495 = vmul.f32 %v411, %v487
    %v496 = vmul.f32 %v413, %v488
    %v497 = vmul.f32 %v415, %v489
    %v498 = vmul.f32 %v417, %v490
    %v499 = vmul.f32 %v419, %v491
    %vm500 = vcmask 523264
    %v502 = vsel %vm500, %v92, 0
    %v505 = vsel %vm500, %v93, 0
    %v508 = vsel %vm500, %v94, 0
    %v511 = vsel %vm500, %v95, 0
    %513 = vmatprep.subr.mxu0 %v492
    %514 = vmatpush1.msra.mxu0 %v452
    %515 = vmatprep.subr.mxu0 %v493
    %516 = vmatpush1.msra.mxu0 %v453
    %517 = vmatprep.subr.mxu0 %v494
    %518 = vmatpush1.msra.mxu0 %v454
    %519 = vmatprep.subr.mxu0 %v495
    %520 = vmatpush1.msra.mxu0 %v455
    %521 = vmatprep.subr.mxu0 %v496
    %522 = vmatpush1.msra.mxu0 %v456
    %523 = vmatprep.subr.mxu0 %v497
    %524 = vmatpush1.msra.mxu0 %v457
    %525 = vmatprep.subr.mxu0 %v498
    %526 = vmatpush1.msra.mxu0 %v458
    %527 = vmatprep.subr.mxu0 %v499
    %528 = vmatpush1.msra.mxu0 %v459
    %529 = vmatprep.subr.mxu0 0.0
    %530 = vmatpush1.msra.mxu0 0.0
    %531 = vmatprep.subr.mxu0 0.0
    %532 = vmatpush1.msra.mxu0 0.0
    %533 = vmatprep.subr.mxu0 0.0
    %534 = vmatpush1.msra.mxu0 0.0
    %535 = vmatprep.subr.mxu0 0.0
    %536 = vmatpush1.msra.mxu0 0.0
    %537 = vmatprep.subr.mxu0 0.0
    %538 = vmatpush1.msra.mxu0 0.0
    %539 = vmatprep.subr.mxu0 0.0
    %540 = vmatpush1.msra.mxu0 0.0
    %541 = vmatprep.subr.mxu0 0.0
    %542 = vmatpush1.msra.mxu0 0.0
    %543 = vmatprep.subr.mxu0 0.0
    %544 = vmatpush1.msra.mxu0 0.0
    %545 = vmatprep.subr.mxu0 0.0
    %546 = vmatpush1.msra.mxu0 0.0
    %547 = vmatprep.subr.mxu0 0.0
    %548 = vmatpush1.msra.mxu0 0.0
    %549 = vmatprep.subr.mxu0 0.0
    %550 = vmatpush1.msra.mxu0 0.0
    %551 = vmatprep.subr.mxu0 0.0
    %552 = vmatpush1.msra.mxu0 0.0
    %553 = vmatprep.subr.mxu0 0.0
    %554 = vmatpush1.msra.mxu0 0.0
    %555 = vmatprep.subr.mxu0 0.0
    %556 = vmatpush1.msra.mxu0 0.0
    %557 = vmatprep.subr.mxu0 0.0
    %558 = vmatpush1.msra.mxu0 0.0
    %559 = vmatprep.subr.mxu0 0.0
    %560 = vmatpush1.msra.mxu0 0.0
    %561 = vmatprep.subr.mxu0 0.0
    %562 = vmatpush1.msra.mxu0 0.0
    %563 = vmatprep.subr.mxu0 0.0
    %564 = vmatpush1.msra.mxu0 0.0
    %565 = vmatprep.subr.mxu0 0.0
    %566 = vmatpush1.msra.mxu0 0.0
    %567 = vmatprep.subr.mxu0 0.0
    %568 = vmatpush1.msra.mxu0 0.0
    %569 = vmatprep.subr.mxu0 0.0
    %570 = vmatpush1.msra.mxu0 0.0
    %571 = vmatprep.subr.mxu0 0.0
    %572 = vmatpush1.msra.mxu0 0.0
    %573 = vmatprep.subr.mxu0 0.0
    %574 = vmatpush1.msra.mxu0 0.0
    %575 = vmatprep.subr.mxu0 0.0
    %576 = vmatpush1.msra.mxu0 0.0
    %577 = vmatprep.mubr.f32.mxu0 0.0
    %578 = vmatmul.mubr.f32.gmra.mrb[0].mxu0 %v502
    %v579 = vpop.f32.mrb[0].mxu0
    %v580 = vadd.f32 0.0, %v579
    %v581 = vpop.f32.mrb[0].mxu0
    %v582 = vadd.f32 0.0, %v581
    %583 = vmatprep.mubr.f32.mxu0 0.0
    %584 = vmatmul.mubr.f32.gmra.mrb[0].mxu0 %v505
    %v585 = vpop.f32.mrb[0].mxu0
    %v586 = vadd.f32 0.0, %v585
    %v587 = vpop.f32.mrb[0].mxu0
    %v588 = vadd.f32 0.0, %v587
    %589 = vmatprep.mubr.f32.mxu0 0.0
    %590 = vmatmul.mubr.f32.gmra.mrb[0].mxu0 %v508
    %v591 = vpop.f32.mrb[0].mxu0
    %v592 = vadd.f32 0.0, %v591
    %v593 = vpop.f32.mrb[0].mxu0
    %v594 = vadd.f32 0.0, %v593
    %595 = vmatprep.mubr.f32.mxu0 0.0
    %596 = vmatmul.mubr.f32.gmra.mrb[0].mxu0 %v511
    %v597 = vpop.f32.mrb[0].mxu0
    %v598 = vadd.f32 0.0, %v597
    %v599 = vpop.f32.mrb[0].mxu0
    %v600 = vadd.f32 0.0, %v599
    %601 = vdwg.mxu0
    %v602 = vsub.f32 %v580, %v280
    %v603 = vsub.f32 %v582, %v282
    %v604 = vsub.f32 %v586, %v286
    %v605 = vsub.f32 %v588, %v288
    %v606 = vsub.f32 %v592, %v292
    %v607 = vsub.f32 %v594, %v294
    %v608 = vsub.f32 %v598, %v298
    %v609 = vsub.f32 %v600, %v300
    %610 = vset.pattern.permute.xlu0 0
    %611 = vperm.xlu0 %610, %v96
    %v612 = vpop.permute.xlu0 %611
    %614 = vset.pattern.permute.xlu0 0
    %615 = vperm.xlu0 %614, %v97
    %v616 = vpop.permute.xlu0 %615
    %618 = vset.pattern.permute.xlu0 0
    %619 = vperm.xlu0 %618, %v98
    %v620 = vpop.permute.xlu0 %619
    %622 = vset.pattern.permute.xlu0 0
    %623 = vperm.xlu0 %622, %v99
    %v624 = vpop.permute.xlu0 %623
    %v626 = vadd.f32 %v602, %v612
    %v627 = vadd.f32 %v603, %v612
    %v628 = vadd.f32 %v604, %v616
    %v629 = vadd.f32 %v605, %v616
    %v630 = vadd.f32 %v606, %v620
    %v631 = vadd.f32 %v607, %v620
    %v632 = vadd.f32 %v608, %v624
    %v633 = vadd.f32 %v609, %v624
    %v634 = vmax.f32 %v626, 0.0
    %v635 = vmax.f32 %v627, 0.0
    %v636 = vmax.f32 %v628, 0.0
    %v637 = vmax.f32 %v629, 0.0
    %v638 = vmax.f32 %v630, 0.0
    %v639 = vmax.f32 %v631, 0.0
    %v640 = vmax.f32 %v632, 0.0
    %v641 = vmax.f32 %v633, 0.0
    %v642 = vadd.f32 %v120, %v634
    %v643 = vadd.f32 %v121, %v635
    %v644 = vadd.f32 %v122, %v636
    %v645 = vadd.f32 %v123, %v637
    %v646 = vadd.f32 %v124, %v638
    %v647 = vadd.f32 %v125, %v639
    %v648 = vadd.f32 %v126, %v640
    %v649 = vadd.f32 %v127, %v641
    %650 = vst [vmem:[#allocation3 + $0x40] sm:$0xff] %v642
    %651 = vst [vmem:[#allocation3 + $0x50] sm:$0xff] %v644
    %652 = vst [vmem:[#allocation3 + $0x60] sm:$0xff] %v646
    %653 = vst [vmem:[#allocation3 + $0x70] sm:$0xff] %v648
    %v654 = vld [vmem:[#allocation2 + $0x8] sm:$0xff]
    %v655 = vld [vmem:[#allocation2 + $0x28] sm:$0xff]
    %v656 = vld [vmem:[#allocation2 + $0x48] sm:$0xff]
    %v657 = vld [vmem:[#allocation2 + $0x68] sm:$0xff]
    %658 = vst [vmem:[#allocation3 + $0x48] sm:$0xff] %v654
    %659 = vst [vmem:[#allocation3 + $0x58] sm:$0xff] %v655
    %660 = vst [vmem:[#allocation3 + $0x68] sm:$0xff] %v656
    %661 = vst [vmem:[#allocation3 + $0x78] sm:$0xff] %v657
    %662 = vst [vmem:[#allocation2] sm:$0xff] %v642
    %663 = vst [vmem:[#allocation2 + $0x20] sm:$0xff] %v644
    %664 = vst [vmem:[#allocation2 + $0x40] sm:$0xff] %v646
    %665 = vst [vmem:[#allocation2 + $0x60] sm:$0xff] %v648
    %666 = vst [vmem:[%s54 + $0x40] sm:$0xff] %v643
    %667 = vst [vmem:[%s54 + $0x50] sm:$0xff] %v645
    %668 = vst [vmem:[%s54 + $0x60] sm:$0xff] %v647
    %669 = vst [vmem:[%s54 + $0x70] sm:$0xff] %v649
    %v670 = vld [vmem:[#allocation2 + $0x18] sm:$0xff]
    %v671 = vld [vmem:[#allocation2 + $0x38] sm:$0xff]
    %v672 = vld [vmem:[#allocation2 + $0x58] sm:$0xff]
    %v673 = vld [vmem:[#allocation2 + $0x78] sm:$0xff]
    %674 = vst [vmem:[%s54 + $0x48] sm:$0xff] %v670
    %675 = vst [vmem:[%s54 + $0x58] sm:$0xff] %v671
    %676 = vst [vmem:[%s54 + $0x68] sm:$0xff] %v672
    %677 = vst [vmem:[%s54 + $0x78] sm:$0xff] %v673
    %678 = vst [vmem:[#allocation2 + $0x10] sm:$0xff] %v643
    %679 = vst [vmem:[#allocation2 + $0x30] sm:$0xff] %v645
    %680 = vst [vmem:[#allocation2 + $0x50] sm:$0xff] %v647
    %681 = vst [vmem:[#allocation2 + $0x70] sm:$0xff] %v649
    %v682 = vld [vmem:[#allocation2] sm:$0xff]
    %v683 = vld [vmem:[#allocation2 + $0x8] sm:$0xff]
    %v684 = vld [vmem:[#allocation2 + $0x10] sm:$0xff]
    %v685 = vld [vmem:[#allocation2 + $0x18] sm:$0xff]
    %v686 = vld [vmem:[#allocation2 + $0x20] sm:$0xff]
    %v687 = vld [vmem:[#allocation2 + $0x28] sm:$0xff]
    %v688 = vld [vmem:[#allocation2 + $0x30] sm:$0xff]
    %v689 = vld [vmem:[#allocation2 + $0x38] sm:$0xff]
    %v690 = vld [vmem:[#allocation2 + $0x40] sm:$0xff]
    %v691 = vld [vmem:[#allocation2 + $0x48] sm:$0xff]
    %v692 = vld [vmem:[#allocation2 + $0x50] sm:$0xff]
    %v693 = vld [vmem:[#allocation2 + $0x58] sm:$0xff]
    %v694 = vld [vmem:[#allocation2 + $0x60] sm:$0xff]
    %v695 = vld [vmem:[#allocation2 + $0x68] sm:$0xff]
    %v696 = vld [vmem:[#allocation2 + $0x70] sm:$0xff]
    %v697 = vld [vmem:[#allocation2 + $0x78] sm:$0xff]
    %v698 = vld [vmem:[%s2 + $0x60] sm:$0xff]
    %v699 = vld [vmem:[%s2 + $0x68] sm:$0xff]
    %v700 = vld [vmem:[%s2 + $0x70] sm:$0xff]
    %v701 = vld [vmem:[%s2 + $0x78] sm:$0xff]
    %v702 = vld [vmem:[%s2 + $0x80] sm:$0xff]
    %v703 = vld [vmem:[%s2 + $0x88] sm:$0xff]
    %v704 = vld [vmem:[%s2 + $0x90] sm:$0xff]
    %v705 = vld [vmem:[%s2 + $0x98] sm:$0xff]
    %v706 = vld [vmem:[%s3 + $0x20] sm:$0xff]
    %v707 = vld [vmem:[%s3 + $0x28] sm:$0xff]
    %v708 = vld [vmem:[%s3 + $0x30] sm:$0xff]
    %v709 = vld [vmem:[%s3 + $0x38] sm:$0xff]
    %v710 = vld [vmem:[%s4] sm:$0xff]
    %v711 = vld [vmem:[%s4 + $0x8] sm:$0xff]
    %v712 = vld [vmem:[%s4 + $0x10] sm:$0xff]
    %v713 = vld [vmem:[%s4 + $0x18] sm:$0xff]
    %715 = vset.pattern.permute.xlu0 3
    %716 = vperm.xlu0 %715, %v710
    %v717 = vpop.permute.xlu0 %716
    %720 = vset.pattern.permute.xlu0 3
    %721 = vperm.xlu0 %720, %v711
    %v722 = vpop.permute.xlu0 %721
    %725 = vset.pattern.permute.xlu0 3
    %726 = vperm.xlu0 %725, %v712
    %v727 = vpop.permute.xlu0 %726
    %730 = vset.pattern.permute.xlu0 3
    %731 = vperm.xlu0 %730, %v713
    %v732 = vpop.permute.xlu0 %731
    %v734 = vadd.f32 %v682, %v717
    %v735 = vadd.f32 %v683, %v717
    %v736 = vadd.f32 %v684, %v717
    %v737 = vadd.f32 %v685, %v717
    %v738 = vadd.f32 %v686, %v722
    %v739 = vadd.f32 %v687, %v722
    %v740 = vadd.f32 %v688, %v722
    %v741 = vadd.f32 %v689, %v722
    %v742 = vadd.f32 %v690, %v727
    %v743 = vadd.f32 %v691, %v727
    %v744 = vadd.f32 %v692, %v727
    %v745 = vadd.f32 %v693, %v727
    %v746 = vadd.f32 %v694, %v732
    %v747 = vadd.f32 %v695, %v732
    %v748 = vadd.f32 %v696, %v732
    %v749 = vadd.f32 %v697, %v732
    %v751 = vsel %vm128, %v698, 0
    %v754 = vsel %vm128, %v699, 0
    %v757 = vsel %vm128, %v700, 0
    %v760 = vsel %vm128, %v701, 0
    %v763 = vsel %vm128, %v702, 0
    %v766 = vsel %vm128, %v703, 0
    %v769 = vsel %vm128, %v704, 0
    %v772 = vsel %vm128, %v705, 0
    %774 = vmatprep.subr.mxu0 %v735
    %775 = vmatpush1.msra.mxu0 %v734
    %776 = vmatprep.subr.mxu0 %v739
    %777 = vmatpush1.msra.mxu0 %v738
    %778 = vmatprep.subr.mxu0 %v743
    %779 = vmatpush1.msra.mxu0 %v742
    %780 = vmatprep.subr.mxu0 %v747
    %781 = vmatpush1.msra.mxu0 %v746
    %782 = vmatprep.subr.mxu0 0.0
    %783 = vmatpush1.msra.mxu0 0.0
    %784 = vmatprep.subr.mxu0 0.0
    %785 = vmatpush1.msra.mxu0 0.0
    %786 = vmatprep.subr.mxu0 0.0
    %787 = vmatpush1.msra.mxu0 0.0
    %788 = vmatprep.subr.mxu0 0.0
    %789 = vmatpush1.msra.mxu0 0.0
    %790 = vmatprep.subr.mxu0 0.0
    %791 = vmatpush1.msra.mxu0 0.0
    %792 = vmatprep.subr.mxu0 0.0
    %793 = vmatpush1.msra.mxu0 0.0
    %794 = vmatprep.subr.mxu0 0.0
    %795 = vmatpush1.msra.mxu0 0.0
    %796 = vmatprep.subr.mxu0 0.0
    %797 = vmatpush1.msra.mxu0 0.0
    %798 = vmatprep.subr.mxu0 0.0
    %799 = vmatpush1.msra.mxu0 0.0
    %800 = vmatprep.subr.mxu0 0.0
    %801 = vmatpush1.msra.mxu0 0.0
    %802 = vmatprep.subr.mxu0 0.0
    %803 = vmatpush1.msra.mxu0 0.0
    %804 = vmatprep.subr.mxu0 0.0
    %805 = vmatpush1.msra.mxu0 0.0
    %806 = vmatprep.subr.mxu0 0.0
    %807 = vmatpush1.msra.mxu0 0.0
    %808 = vmatprep.subr.mxu0 0.0
    %809 = vmatpush1.msra.mxu0 0.0
    %810 = vmatprep.subr.mxu0 0.0
    %811 = vmatpush1.msra.mxu0 0.0
    %812 = vmatprep.subr.mxu0 0.0
    %813 = vmatpush1.msra.mxu0 0.0
    %814 = vmatprep.subr.mxu0 0.0
    %815 = vmatpush1.msra.mxu0 0.0
    %816 = vmatprep.subr.mxu0 0.0
    %817 = vmatpush1.msra.mxu0 0.0
    %818 = vmatprep.subr.mxu0 0.0
    %819 = vmatpush1.msra.mxu0 0.0
    %820 = vmatprep.subr.mxu0 0.0
    %821 = vmatpush1.msra.mxu0 0.0
    %822 = vmatprep.subr.mxu0 0.0
    %823 = vmatpush1.msra.mxu0 0.0
    %824 = vmatprep.subr.mxu0 0.0
    %825 = vmatpush1.msra.mxu0 0.0
    %826 = vmatprep.subr.mxu0 0.0
    %827 = vmatpush1.msra.mxu0 0.0
    %828 = vmatprep.subr.mxu0 0.0
    %829 = vmatpush1.msra.mxu0 0.0
    %830 = vmatprep.subr.mxu0 0.0
    %831 = vmatpush1.msra.mxu0 0.0
    %832 = vmatprep.subr.mxu0 0.0
    %833 = vmatpush1.msra.mxu0 0.0
    %834 = vmatprep.subr.mxu0 0.0
    %835 = vmatpush1.msra.mxu0 0.0
    %836 = vmatprep.subr.mxu0 0.0
    %837 = vmatpush1.msra.mxu0 0.0
    %838 = vmatprep.mubr.f32.mxu0 0.0
    %839 = vmatmul.mubr.f32.gmra.mrb[0].mxu0 %v751
    %v840 = vpop.f32.mrb[0].mxu0
    %v841 = vadd.f32 0.0, %v840
    %v842 = vpop.f32.mrb[0].mxu0
    %v843 = vadd.f32 0.0, %v842
    %844 = vmatprep.mubr.f32.mxu0 0.0
    %845 = vmatmul.mubr.f32.gmra.mrb[0].mxu0 %v754
    %v846 = vpop.f32.mrb[0].mxu0
    %v847 = vadd.f32 0.0, %v846
    %v848 = vpop.f32.mrb[0].mxu0
    %v849 = vadd.f32 0.0, %v848
    %850 = vmatprep.mubr.f32.mxu0 0.0
    %851 = vmatmul.mubr.f32.gmra.mrb[0].mxu0 %v757
    %v852 = vpop.f32.mrb[0].mxu0
    %v853 = vadd.f32 0.0, %v852
    %v854 = vpop.f32.mrb[0].mxu0
    %v855 = vadd.f32 0.0, %v854
    %856 = vmatprep.mubr.f32.mxu0 0.0
    %857 = vmatmul.mubr.f32.gmra.mrb[0].mxu0 %v760
    %v858 = vpop.f32.mrb[0].mxu0
    %v859 = vadd.f32 0.0, %v858
    %v860 = vpop.f32.mrb[0].mxu0
    %v861 = vadd.f32 0.0, %v860
    %862 = vmatprep.mubr.f32.mxu0 0.0
    %863 = vmatmul.mubr.f32.gmra.mrb[0].mxu0 %v763
    %v864 = vpop.f32.mrb[0].mxu0
    %v865 = vadd.f32 0.0, %v864
    %v866 = vpop.f32.mrb[0].mxu0
    %v867 = vadd.f32 0.0, %v866
    %868 = vmatprep.mubr.f32.mxu0 0.0
    %869 = vmatmul.mubr.f32.gmra.mrb[0].mxu0 %v766
    %v870 = vpop.f32.mrb[0].mxu0
    %v871 = vadd.f32 0.0, %v870
    %v872 = vpop.f32.mrb[0].mxu0
    %v873 = vadd.f32 0.0, %v872
    %874 = vmatprep.mubr.f32.mxu0 0.0
    %875 = vmatmul.mubr.f32.gmra.mrb[0].mxu0 %v769
    %v876 = vpop.f32.mrb[0].mxu0
    %v877 = vadd.f32 0.0, %v876
    %v878 = vpop.f32.mrb[0].mxu0
    %v879 = vadd.f32 0.0, %v878
    %880 = vmatprep.mubr.f32.mxu0 0.0
    %881 = vmatmul.mubr.f32.gmra.mrb[0].mxu0 %v772
    %v882 = vpop.f32.mrb[0].mxu0
    %v883 = vadd.f32 0.0, %v882
    %v884 = vpop.f32.mrb[0].mxu0
    %v885 = vadd.f32 0.0, %v884
    %886 = vdwg.mxu0
    %887 = vmatprep.subr.mxu0 %v737
    %888 = vmatpush1.msra.mxu0 %v736
    %889 = vmatprep.subr.mxu0 %v741
    %890 = vmatpush1.msra.mxu0 %v740
    %891 = vmatprep.subr.mxu0 %v745
    %892 = vmatpush1.msra.mxu0 %v744
    %893 = vmatprep.subr.mxu0 %v749
    %894 = vmatpush1.msra.mxu0 %v748
    %895 = vmatprep.subr.mxu0 0.0
    %896 = vmatpush1.msra.mxu0 0.0
    %897 = vmatprep.subr.mxu0 0.0
    %898 = vmatpush1.msra.mxu0 0.0
    %899 = vmatprep.subr.mxu0 0.0
    %900 = vmatpush1.msra.mxu0 0.0
    %901 = vmatprep.subr.mxu0 0.0
    %902 = vmatpush1.msra.mxu0 0.0
    %903 = vmatprep.subr.mxu0 0.0
    %904 = vmatpush1.msra.mxu0 0.0
    %905 = vmatprep.subr.mxu0 0.0
    %906 = vmatpush1.msra.mxu0 0.0
    %907 = vmatprep.subr.mxu0 0.0
    %908 = vmatpush1.msra.mxu0 0.0
    %909 = vmatprep.subr.mxu0 0.0
    %910 = vmatpush1.msra.mxu0 0.0
    %911 = vmatprep.subr.mxu0 0.0
    %912 = vmatpush1.msra.mxu0 0.0
    %913 = vmatprep.subr.mxu0 0.0
    %914 = vmatpush1.msra.mxu0 0.0
    %915 = vmatprep.subr.mxu0 0.0
    %916 = vmatpush1.msra.mxu0 0.0
    %917 = vmatprep.subr.mxu0 0.0
    %918 = vmatpush1.msra.mxu0 0.0
    %919 = vmatprep.subr.mxu0 0.0
    %920 = vmatpush1.msra.mxu0 0.0
    %921 = vmatprep.subr.mxu0 0.0
    %922 = vmatpush1.msra.mxu0 0.0
    %923 = vmatprep.subr.mxu0 0.0
    %924 = vmatpush1.msra.mxu0 0.0
    %925 = vmatprep.subr.mxu0 0.0
    %926 = vmatpush1.msra.mxu0 0.0
    %927 = vmatprep.subr.mxu0 0.0
    %928 = vmatpush1.msra.mxu0 0.0
    %929 = vmatprep.subr.mxu0 0.0
    %930 = vmatpush1.msra.mxu0 0.0
    %931 = vmatprep.subr.mxu0 0.0
    %932 = vmatpush1.msra.mxu0 0.0
    %933 = vmatprep.subr.mxu0 0.0
    %934 = vmatpush1.msra.mxu0 0.0
    %935 = vmatprep.subr.mxu0 0.0
    %936 = vmatpush1.msra.mxu0 0.0
    %937 = vmatprep.subr.mxu0 0.0
    %938 = vmatpush1.msra.mxu0 0.0
    %939 = vmatprep.subr.mxu0 0.0
    %940 = vmatpush1.msra.mxu0 0.0
    %941 = vmatprep.subr.mxu0 0.0
    %942 = vmatpush1.msra.mxu0 0.0
    %943 = vmatprep.subr.mxu0 0.0
    %944 = vmatpush1.msra.mxu0 0.0
    %945 = vmatprep.subr.mxu0 0.0
    %946 = vmatpush1.msra.mxu0 0.0
    %947 = vmatprep.subr.mxu0 0.0
    %948 = vmatpush1.msra.mxu0 0.0
    %949 = vmatprep.subr.mxu0 0.0
    %950 = vmatpush1.msra.mxu0 0.0
    %951 = vmatprep.mubr.f32.mxu0 0.0
    %952 = vmatmul.mubr.f32.gmra.mrb[0].mxu0 %v751
    %v953 = vpop.f32.mrb[0].mxu0
    %v954 = vadd.f32 0.0, %v953
    %v955 = vpop.f32.mrb[0].mxu0
    %v956 = vadd.f32 0.0, %v955
    %957 = vmatprep.mubr.f32.mxu0 0.0
    %958 = vmatmul.mubr.f32.gmra.mrb[0].mxu0 %v754
    %v959 = vpop.f32.mrb[0].mxu0
    %v960 = vadd.f32 0.0, %v959
    %v961 = vpop.f32.mrb[0].mxu0
    %v962 = vadd.f32 0.0, %v961
    %963 = vmatprep.mubr.f32.mxu0 0.0
    %964 = vmatmul.mubr.f32.gmra.mrb[0].mxu0 %v757
    %v965 = vpop.f32.mrb[0].mxu0
    %v966 = vadd.f32 0.0, %v965
    %v967 = vpop.f32.mrb[0].mxu0
    %v968 = vadd.f32 0.0, %v967
    %969 = vmatprep.mubr.f32.mxu0 0.0
    %970 = vmatmul.mubr.f32.gmra.mrb[0].mxu0 %v760
    %v971 = vpop.f32.mrb[0].mxu0
    %v972 = vadd.f32 0.0, %v971
    %v973 = vpop.f32.mrb[0].mxu0
    %v974 = vadd.f32 0.0, %v973
    %975 = vmatprep.mubr.f32.mxu0 0.0
    %976 = vmatmul.mubr.f32.gmra.mrb[0].mxu0 %v763
    %v977 = vpop.f32.mrb[0].mxu0
    %v978 = vadd.f32 0.0, %v977
    %v979 = vpop.f32.mrb[0].mxu0
    %v980 = vadd.f32 0.0, %v979
    %981 = vmatprep.mubr.f32.mxu0 0.0
    %982 = vmatmul.mubr.f32.gmra.mrb[0].mxu0 %v766
    %v983 = vpop.f32.mrb[0].mxu0
    %v984 = vadd.f32 0.0, %v983
    %v985 = vpop.f32.mrb[0].mxu0
    %v986 = vadd.f32 0.0, %v985
    %987 = vmatprep.mubr.f32.mxu0 0.0
    %988 = vmatmul.mubr.f32.gmra.mrb[0].mxu0 %v769
    %v989 = vpop.f32.mrb[0].mxu0
    %v990 = vadd.f32 0.0, %v989
    %v991 = vpop.f32.mrb[0].mxu0
    %v992 = vadd.f32 0.0, %v991
    %993 = vmatprep.mubr.f32.mxu0 0.0
    %994 = vmatmul.mubr.f32.gmra.mrb[0].mxu0 %v772
    %v995 = vpop.f32.mrb[0].mxu0
    %v996 = vadd.f32 0.0, %v995
    %v997 = vpop.f32.mrb[0].mxu0
    %v998 = vadd.f32 0.0, %v997
    %999 = vdwg.mxu0
    %v1000 = vmax.f32 %v841, %v847
    %v1001 = vmax.f32 %v1000, %v853
    %v1002 = vmax.f32 %v1001, %v859
    %v1003 = vrot.slane %v1002, 4
    %v1004 = vmax.f32 %v1002, %v1003
    %v1005 = vrot.slane %v1004, 2
    %v1006 = vmax.f32 %v1004, %v1005
    %v1007 = vrot.slane %v1006, 1
    %v1008 = vmax.f32 %v1006, %v1007
    %v1009 = vmax.f32 %v843, %v849
    %v1010 = vmax.f32 %v1009, %v855
    %v1011 = vmax.f32 %v1010, %v861
    %v1012 = vrot.slane %v1011, 4
    %v1013 = vmax.f32 %v1011, %v1012
    %v1014 = vrot.slane %v1013, 2
    %v1015 = vmax.f32 %v1013, %v1014
    %v1016 = vrot.slane %v1015, 1
    %v1017 = vmax.f32 %v1015, %v1016
    %v1018 = vmax.f32 %v954, %v960
    %v1019 = vmax.f32 %v1018, %v966
    %v1020 = vmax.f32 %v1019, %v972
    %v1021 = vrot.slane %v1020, 4
    %v1022 = vmax.f32 %v1020, %v1021
    %v1023 = vrot.slane %v1022, 2
    %v1024 = vmax.f32 %v1022, %v1023
    %v1025 = vrot.slane %v1024, 1
    %v1026 = vmax.f32 %v1024, %v1025
    %v1027 = vmax.f32 %v956, %v962
    %v1028 = vmax.f32 %v1027, %v968
    %v1029 = vmax.f32 %v1028, %v974
    %v1030 = vrot.slane %v1029, 4
    %v1031 = vmax.f32 %v1029, %v1030
    %v1032 = vrot.slane %v1031, 2
    %v1033 = vmax.f32 %v1031, %v1032
    %v1034 = vrot.slane %v1033, 1
    %v1035 = vmax.f32 %v1033, %v1034
    %v1036 = vsub.f32 %v841, %v1008
    %v1037 = vsub.f32 %v843, %v1017
    %v1038 = vsub.f32 %v954, %v1026
    %v1039 = vsub.f32 %v956, %v1035
    %v1040 = vsub.f32 %v847, %v1008
    %v1041 = vsub.f32 %v849, %v1017
    %v1042 = vsub.f32 %v960, %v1026
    %v1043 = vsub.f32 %v962, %v1035
    %v1044 = vsub.f32 %v853, %v1008
    %v1045 = vsub.f32 %v855, %v1017
    %v1046 = vsub.f32 %v966, %v1026
    %v1047 = vsub.f32 %v968, %v1035
    %v1048 = vsub.f32 %v859, %v1008
    %v1049 = vsub.f32 %v861, %v1017
    %v1050 = vsub.f32 %v972, %v1026
    %v1051 = vsub.f32 %v974, %v1035
    %v1052 = vmul.f32 %v1036, 1.442695
    %v1053 = vpow.pop %v1052
    %v1054 = vmul.f32 %v1037, 1.442695
    %v1055 = vpow.pop %v1054
    %v1056 = vmul.f32 %v1038, 1.442695
    %v1057 = vpow.pop %v1056
    %v1058 = vmul.f32 %v1039, 1.442695
    %v1059 = vpow.pop %v1058
    %v1060 = vmul.f32 %v1040, 1.442695
    %v1061 = vpow.pop %v1060
    %v1062 = vmul.f32 %v1041, 1.442695
    %v1063 = vpow.pop %v1062
    %v1064 = vmul.f32 %v1042, 1.442695
    %v1065 = vpow.pop %v1064
    %v1066 = vmul.f32 %v1043, 1.442695
    %v1067 = vpow.pop %v1066
    %v1068 = vmul.f32 %v1044, 1.442695
    %v1069 = vpow.pop %v1068
    %v1070 = vmul.f32 %v1045, 1.442695
    %v1071 = vpow.pop %v1070
    %v1072 = vmul.f32 %v1046, 1.442695
    %v1073 = vpow.pop %v1072
    %v1074 = vmul.f32 %v1047, 1.442695
    %v1075 = vpow.pop %v1074
    %v1076 = vmul.f32 %v1048, 1.442695
    %v1077 = vpow.pop %v1076
    %v1078 = vmul.f32 %v1049, 1.442695
    %v1079 = vpow.pop %v1078
    %v1080 = vmul.f32 %v1050, 1.442695
    %v1081 = vpow.pop %v1080
    %v1082 = vmul.f32 %v1051, 1.442695
    %v1083 = vpow.pop %v1082
    %v1084 = vadd.f32 %v1053, %v1061
    %v1085 = vadd.f32 %v1084, %v1069
    %v1086 = vadd.f32 %v1085, %v1077
    %v1087 = vrot.slane %v1086, 4
    %v1088 = vadd.f32 %v1086, %v1087
    %v1089 = vrot.slane %v1088, 2
    %v1090 = vadd.f32 %v1088, %v1089
    %v1091 = vrot.slane %v1090, 1
    %v1092 = vadd.f32 %v1090, %v1091
    %v1093 = vadd.f32 %v1055, %v1063
    %v1094 = vadd.f32 %v1093, %v1071
    %v1095 = vadd.f32 %v1094, %v1079
    %v1096 = vrot.slane %v1095, 4
    %v1097 = vadd.f32 %v1095, %v1096
    %v1098 = vrot.slane %v1097, 2
    %v1099 = vadd.f32 %v1097, %v1098
    %v1100 = vrot.slane %v1099, 1
    %v1101 = vadd.f32 %v1099, %v1100
    %v1102 = vadd.f32 %v1057, %v1065
    %v1103 = vadd.f32 %v1102, %v1073
    %v1104 = vadd.f32 %v1103, %v1081
    %v1105 = vrot.slane %v1104, 4
    %v1106 = vadd.f32 %v1104, %v1105
    %v1107 = vrot.slane %v1106, 2
    %v1108 = vadd.f32 %v1106, %v1107
    %v1109 = vrot.slane %v1108, 1
    %v1110 = vadd.f32 %v1108, %v1109
    %v1111 = vadd.f32 %v1059, %v1067
    %v1112 = vadd.f32 %v1111, %v1075
    %v1113 = vadd.f32 %v1112, %v1083
    %v1114 = vrot.slane %v1113, 4
    %v1115 = vadd.f32 %v1113, %v1114
    %v1116 = vrot.slane %v1115, 2
    %v1117 = vadd.f32 %v1115, %v1116
    %v1118 = vrot.slane %v1117, 1
    %v1119 = vadd.f32 %v1117, %v1118
    %v1120 = vrcp.pop %v1092
    %v1121 = vrcp.pop %v1101
    %v1122 = vrcp.pop %v1110
    %v1123 = vrcp.pop %v1119
    %v1124 = vmul.f32 %v1053, %v1120
    %v1125 = vmul.f32 %v1055, %v1121
    %v1126 = vmul.f32 %v1057, %v1122
    %v1127 = vmul.f32 %v1059, %v1123
    %v1128 = vmul.f32 %v1061, %v1120
    %v1129 = vmul.f32 %v1063, %v1121
    %v1130 = vmul.f32 %v1065, %v1122
    %v1131 = vmul.f32 %v1067, %v1123
    %v1132 = vmul.f32 %v1069, %v1120
    %v1133 = vmul.f32 %v1071, %v1121
    %v1134 = vmul.f32 %v1073, %v1122
    %v1135 = vmul.f32 %v1075, %v1123
    %v1136 = vmul.f32 %v1077, %v1120
    %v1137 = vmul.f32 %v1079, %v1121
    %v1138 = vmul.f32 %v1081, %v1122
    %v1139 = vmul.f32 %v1083, %v1123
    %v1140 = vadd.f32 %v1124, %v1125
    %1141 = vadd.xlane.f32.xlu0 %v1140
    %v1142 = vpop.xlane.xlu0 %1141
    %v1143 = vadd.f32 %v1128, %v1129
    %1144 = vadd.xlane.f32.xlu0 %v1143
    %v1145 = vpop.xlane.xlu0 %1144
    %v1146 = vadd.f32 %v1132, %v1133
    %1147 = vadd.xlane.f32.xlu0 %v1146
    %v1148 = vpop.xlane.xlu0 %1147
    %v1149 = vadd.f32 %v1136, %v1137
    %1150 = vadd.xlane.f32.xlu0 %v1149
    %v1151 = vpop.xlane.xlu0 %1150
    %v1152 = vadd.f32 %v1142, 1e-09
    %v1153 = vadd.f32 %v1145, 1e-09
    %v1154 = vadd.f32 %v1148, 1e-09
    %v1155 = vadd.f32 %v1151, 1e-09
    %v1156 = vrcp.pop %v1152
    %v1157 = vrcp.pop %v1153
    %v1158 = vrcp.pop %v1154
    %v1159 = vrcp.pop %v1155
    %v1160 = vmul.f32 %v1124, %v1156
    %v1161 = vmul.f32 %v1125, %v1156
    %v1162 = vmul.f32 %v1128, %v1157
    %v1163 = vmul.f32 %v1129, %v1157
    %v1164 = vmul.f32 %v1132, %v1158
    %v1165 = vmul.f32 %v1133, %v1158
    %v1166 = vmul.f32 %v1136, %v1159
    %v1167 = vmul.f32 %v1137, %v1159
    %v1168 = vadd.f32 %v1126, %v1127
    %1169 = vadd.xlane.f32.xlu0 %v1168
    %v1170 = vpop.xlane.xlu0 %1169
    %v1171 = vadd.f32 %v1130, %v1131
    %1172 = vadd.xlane.f32.xlu0 %v1171
    %v1173 = vpop.xlane.xlu0 %1172
    %v1174 = vadd.f32 %v1134, %v1135
    %1175 = vadd.xlane.f32.xlu0 %v1174
    %v1176 = vpop.xlane.xlu0 %1175
    %v1177 = vadd.f32 %v1138, %v1139
    %1178 = vadd.xlane.f32.xlu0 %v1177
    %v1179 = vpop.xlane.xlu0 %1178
    %v1180 = vadd.f32 %v1170, 1e-09
    %v1181 = vadd.f32 %v1173, 1e-09
    %v1182 = vadd.f32 %v1176, 1e-09
    %v1183 = vadd.f32 %v1179, 1e-09
    %v1184 = vrcp.pop %v1180
    %v1185 = vrcp.pop %v1181
    %v1186 = vrcp.pop %v1182
    %v1187 = vrcp.pop %v1183
    %v1188 = vmul.f32 %v1126, %v1184
    %v1189 = vmul.f32 %v1127, %v1184
    %v1190 = vmul.f32 %v1130, %v1185
    %v1191 = vmul.f32 %v1131, %v1185
    %v1192 = vmul.f32 %v1134, %v1186
    %v1193 = vmul.f32 %v1135, %v1186
    %v1194 = vmul.f32 %v1138, %v1187
    %v1195 = vmul.f32 %v1139, %v1187
    %v1197 = vsel %vm128, %v706, 0
    %v1200 = vsel %vm128, %v707, 0
    %v1203 = vsel %vm128, %v708, 0
    %v1206 = vsel %vm128, %v709, 0
    %1208 = vmatprep.subr.mxu0 %v1161
    %1209 = vmatpush1.msra.mxu0 %v1160
    %1210 = vmatprep.subr.mxu0 %v1163
    %1211 = vmatpush1.msra.mxu0 %v1162
    %1212 = vmatprep.subr.mxu0 %v1165
    %1213 = vmatpush1.msra.mxu0 %v1164
    %1214 = vmatprep.subr.mxu0 %v1167
    %1215 = vmatpush1.msra.mxu0 %v1166
    %1216 = vmatprep.subr.mxu0 0.0
    %1217 = vmatpush1.msra.mxu0 0.0
    %1218 = vmatprep.subr.mxu0 0.0
    %1219 = vmatpush1.msra.mxu0 0.0
    %1220 = vmatprep.subr.mxu0 0.0
    %1221 = vmatpush1.msra.mxu0 0.0
    %1222 = vmatprep.subr.mxu0 0.0
    %1223 = vmatpush1.msra.mxu0 0.0
    %1224 = vmatprep.subr.mxu0 0.0
    %1225 = vmatpush1.msra.mxu0 0.0
    %1226 = vmatprep.subr.mxu0 0.0
    %1227 = vmatpush1.msra.mxu0 0.0
    %1228 = vmatprep.subr.mxu0 0.0
    %1229 = vmatpush1.msra.mxu0 0.0
    %1230 = vmatprep.subr.mxu0 0.0
    %1231 = vmatpush1.msra.mxu0 0.0
    %1232 = vmatprep.subr.mxu0 0.0
    %1233 = vmatpush1.msra.mxu0 0.0
    %1234 = vmatprep.subr.mxu0 0.0
    %1235 = vmatpush1.msra.mxu0 0.0
    %1236 = vmatprep.subr.mxu0 0.0
    %1237 = vmatpush1.msra.mxu0 0.0
    %1238 = vmatprep.subr.mxu0 0.0
    %1239 = vmatpush1.msra.mxu0 0.0
    %1240 = vmatprep.subr.mxu0 0.0
    %1241 = vmatpush1.msra.mxu0 0.0
    %1242 = vmatprep.subr.mxu0 0.0
    %1243 = vmatpush1.msra.mxu0 0.0
    %1244 = vmatprep.subr.mxu0 0.0
    %1245 = vmatpush1.msra.mxu0 0.0
    %1246 = vmatprep.subr.mxu0 0.0
    %1247 = vmatpush1.msra.mxu0 0.0
    %1248 = vmatprep.subr.mxu0 0.0
    %1249 = vmatpush1.msra.mxu0 0.0
    %1250 = vmatprep.subr.mxu0 0.0
    %1251 = vmatpush1.msra.mxu0 0.0
    %1252 = vmatprep.subr.mxu0 0.0
    %1253 = vmatpush1.msra.mxu0 0.0
    %1254 = vmatprep.subr.mxu0 0.0
    %1255 = vmatpush1.msra.mxu0 0.0
    %1256 = vmatprep.subr.mxu0 0.0
    %1257 = vmatpush1.msra.mxu0 0.0
    %1258 = vmatprep.subr.mxu0 0.0
    %1259 = vmatpush1.msra.mxu0 0.0
    %1260 = vmatprep.subr.mxu0 0.0
    %1261 = vmatpush1.msra.mxu0 0.0
    %1262 = vmatprep.subr.mxu0 0.0
    %1263 = vmatpush1.msra.mxu0 0.0
    %1264 = vmatprep.subr.mxu0 0.0
    %1265 = vmatpush1.msra.mxu0 0.0
    %1266 = vmatprep.subr.mxu0 0.0
    %1267 = vmatpush1.msra.mxu0 0.0
    %1268 = vmatprep.subr.mxu0 0.0
    %1269 = vmatpush1.msra.mxu0 0.0
    %1270 = vmatprep.subr.mxu0 0.0
    %1271 = vmatpush1.msra.mxu0 0.0
    %1272 = vmatprep.mubr.f32.mxu0 0.0
    %1273 = vmatmul.mubr.f32.gmra.mrb[0].mxu0 %v1197
    %v1274 = vpop.f32.mrb[0].mxu0
    %v1275 = vadd.f32 0.0, %v1274
    %v1276 = vpop.f32.mrb[0].mxu0
    %v1277 = vadd.f32 0.0, %v1276
    %1278 = vmatprep.mubr.f32.mxu0 0.0
    %1279 = vmatmul.mubr.f32.gmra.mrb[0].mxu0 %v1200
    %v1280 = vpop.f32.mrb[0].mxu0
    %v1281 = vadd.f32 0.0, %v1280
    %v1282 = vpop.f32.mrb[0].mxu0
    %v1283 = vadd.f32 0.0, %v1282
    %1284 = vmatprep.mubr.f32.mxu0 0.0
    %1285 = vmatmul.mubr.f32.gmra.mrb[0].mxu0 %v1203
    %v1286 = vpop.f32.mrb[0].mxu0
    %v1287 = vadd.f32 0.0, %v1286
    %v1288 = vpop.f32.mrb[0].mxu0
    %v1289 = vadd.f32 0.0, %v1288
    %1290 = vmatprep.mubr.f32.mxu0 0.0
    %1291 = vmatmul.mubr.f32.gmra.mrb[0].mxu0 %v1206
    %v1292 = vpop.f32.mrb[0].mxu0
    %v1293 = vadd.f32 0.0, %v1292
    %v1294 = vpop.f32.mrb[0].mxu0
    %v1295 = vadd.f32 0.0, %v1294
    %1296 = vdwg.mxu0
    %1297 = vmatprep.subr.mxu0 %v1189
    %1298 = vmatpush1.msra.mxu0 %v1188
    %1299 = vmatprep.subr.mxu0 %v1191
    %1300 = vmatpush1.msra.mxu0 %v1190
    %1301 = vmatprep.subr.mxu0 %v1193
    %1302 = vmatpush1.msra.mxu0 %v1192
    %1303 = vmatprep.subr.mxu0 %v1195
    %1304 = vmatpush1.msra.mxu0 %v1194
    %1305 = vmatprep.subr.mxu0 0.0
    %1306 = vmatpush1.msra.mxu0 0.0
    %1307 = vmatprep.subr.mxu0 0.0
    %1308 = vmatpush1.msra.mxu0 0.0
    %1309 = vmatprep.subr.mxu0 0.0
    %1310 = vmatpush1.msra.mxu0 0.0
    %1311 = vmatprep.subr.mxu0 0.0
    %1312 = vmatpush1.msra.mxu0 0.0
    %1313 = vmatprep.subr.mxu0 0.0
    %1314 = vmatpush1.msra.mxu0 0.0
    %1315 = vmatprep.subr.mxu0 0.0
    %1316 = vmatpush1.msra.mxu0 0.0
    %1317 = vmatprep.subr.mxu0 0.0
    %1318 = vmatpush1.msra.mxu0 0.0
    %1319 = vmatprep.subr.mxu0 0.0
    %1320 = vmatpush1.msra.mxu0 0.0
    %1321 = vmatprep.subr.mxu0 0.0
    %1322 = vmatpush1.msra.mxu0 0.0
    %1323 = vmatprep.subr.mxu0 0.0
    %1324 = vmatpush1.msra.mxu0 0.0
    %1325 = vmatprep.subr.mxu0 0.0
    %1326 = vmatpush1.msra.mxu0 0.0
    %1327 = vmatprep.subr.mxu0 0.0
    %1328 = vmatpush1.msra.mxu0 0.0
    %1329 = vmatprep.subr.mxu0 0.0
    %1330 = vmatpush1.msra.mxu0 0.0
    %1331 = vmatprep.subr.mxu0 0.0
    %1332 = vmatpush1.msra.mxu0 0.0
    %1333 = vmatprep.subr.mxu0 0.0
    %1334 = vmatpush1.msra.mxu0 0.0
    %1335 = vmatprep.subr.mxu0 0.0
    %1336 = vmatpush1.msra.mxu0 0.0
    %1337 = vmatprep.subr.mxu0 0.0
    %1338 = vmatpush1.msra.mxu0 0.0
    %1339 = vmatprep.subr.mxu0 0.0
    %1340 = vmatpush1.msra.mxu0 0.0
    %1341 = vmatprep.subr.mxu0 0.0
    %1342 = vmatpush1.msra.mxu0 0.0
    %1343 = vmatprep.subr.mxu0 0.0
    %1344 = vmatpush1.msra.mxu0 0.0
    %1345 = vmatprep.subr.mxu0 0.0
    %1346 = vmatpush1.msra.mxu0 0.0
    %1347 = vmatprep.subr.mxu0 0.0
    %1348 = vmatpush1.msra.mxu0 0.0
    %1349 = vmatprep.subr.mxu0 0.0
    %1350 = vmatpush1.msra.mxu0 0.0
    %1351 = vmatprep.subr.mxu0 0.0
    %1352 = vmatpush1.msra.mxu0 0.0
    %1353 = vmatprep.subr.mxu0 0.0
    %1354 = vmatpush1.msra.mxu0 0.0
    %1355 = vmatprep.subr.mxu0 0.0
    %1356 = vmatpush1.msra.mxu0 0.0
    %1357 = vmatprep.subr.mxu0 0.0
    %1358 = vmatpush1.msra.mxu0 0.0
    %1359 = vmatprep.subr.mxu0 0.0
    %1360 = vmatpush1.msra.mxu0 0.0
    %1361 = vmatprep.mubr.f32.mxu0 0.0
    %1362 = vmatmul.mubr.f32.gmra.mrb[0].mxu0 %v1197
    %v1363 = vpop.f32.mrb[0].mxu0
    %v1364 = vadd.f32 0.0, %v1363
    %v1365 = vpop.f32.mrb[0].mxu0
    %v1366 = vadd.f32 0.0, %v1365
    %1367 = vmatprep.mubr.f32.mxu0 0.0
    %1368 = vmatmul.mubr.f32.gmra.mrb[0].mxu0 %v1200
    %v1369 = vpop.f32.mrb[0].mxu0
    %v1370 = vadd.f32 0.0, %v1369
    %v1371 = vpop.f32.mrb[0].mxu0
    %v1372 = vadd.f32 0.0, %v1371
    %1373 = vmatprep.mubr.f32.mxu0 0.0
    %1374 = vmatmul.mubr.f32.gmra.mrb[0].mxu0 %v1203
    %v1375 = vpop.f32.mrb[0].mxu0
    %v1376 = vadd.f32 0.0, %v1375
    %v1377 = vpop.f32.mrb[0].mxu0
    %v1378 = vadd.f32 0.0, %v1377
    %1379 = vmatprep.mubr.f32.mxu0 0.0
    %1380 = vmatmul.mubr.f32.gmra.mrb[0].mxu0 %v1206
    %v1381 = vpop.f32.mrb[0].mxu0
    %v1382 = vadd.f32 0.0, %v1381
    %v1383 = vpop.f32.mrb[0].mxu0
    %v1384 = vadd.f32 0.0, %v1383
    %1385 = vdwg.mxu0
    %v1386 = vsub.f32 %v1275, %v865
    %v1387 = vsub.f32 %v1277, %v867
    %v1388 = vsub.f32 %v1364, %v978
    %v1389 = vsub.f32 %v1366, %v980
    %v1390 = vsub.f32 %v1281, %v871
    %v1391 = vsub.f32 %v1283, %v873
    %v1392 = vsub.f32 %v1370, %v984
    %v1393 = vsub.f32 %v1372, %v986
    %v1394 = vsub.f32 %v1287, %v877
    %v1395 = vsub.f32 %v1289, %v879
    %v1396 = vsub.f32 %v1376, %v990
    %v1397 = vsub.f32 %v1378, %v992
    %v1398 = vsub.f32 %v1293, %v883
    %v1399 = vsub.f32 %v1295, %v885
    %v1400 = vsub.f32 %v1382, %v996
    %v1401 = vsub.f32 %v1384, %v998
    %1402 = vset.pattern.permute.xlu0 2
    %1403 = vperm.xlu0 %1402, %v710
    %v1404 = vpop.permute.xlu0 %1403
    %1406 = vset.pattern.permute.xlu0 2
    %1407 = vperm.xlu0 %1406, %v711
    %v1408 = vpop.permute.xlu0 %1407
    %1410 = vset.pattern.permute.xlu0 2
    %1411 = vperm.xlu0 %1410, %v712
    %v1412 = vpop.permute.xlu0 %1411
    %1414 = vset.pattern.permute.xlu0 2
    %1415 = vperm.xlu0 %1414, %v713
    %v1416 = vpop.permute.xlu0 %1415
    %v1418 = vadd.f32 %v1386, %v1404
    %v1419 = vadd.f32 %v1387, %v1404
    %v1420 = vadd.f32 %v1388, %v1404
    %v1421 = vadd.f32 %v1389, %v1404
    %v1422 = vadd.f32 %v1390, %v1408
    %v1423 = vadd.f32 %v1391, %v1408
    %v1424 = vadd.f32 %v1392, %v1408
    %v1425 = vadd.f32 %v1393, %v1408
    %v1426 = vadd.f32 %v1394, %v1412
    %v1427 = vadd.f32 %v1395, %v1412
    %v1428 = vadd.f32 %v1396, %v1412
    %v1429 = vadd.f32 %v1397, %v1412
    %v1430 = vadd.f32 %v1398, %v1416
    %v1431 = vadd.f32 %v1399, %v1416
    %v1432 = vadd.f32 %v1400, %v1416
    %v1433 = vadd.f32 %v1401, %v1416
    %v1434 = vmax.f32 %v1418, 0.0
    %v1435 = vmax.f32 %v1419, 0.0
    %v1436 = vmax.f32 %v1420, 0.0
    %v1437 = vmax.f32 %v1421, 0.0
    %v1438 = vmax.f32 %v1422, 0.0
    %v1439 = vmax.f32 %v1423, 0.0
    %v1440 = vmax.f32 %v1424, 0.0
    %v1441 = vmax.f32 %v1425, 0.0
    %v1442 = vmax.f32 %v1426, 0.0
    %v1443 = vmax.f32 %v1427, 0.0
    %v1444 = vmax.f32 %v1428, 0.0
    %v1445 = vmax.f32 %v1429, 0.0
    %v1446 = vmax.f32 %v1430, 0.0
    %v1447 = vmax.f32 %v1431, 0.0
    %v1448 = vmax.f32 %v1432, 0.0
    %v1449 = vmax.f32 %v1433, 0.0
    %v1450 = vadd.f32 %v734, %v1434
    %v1451 = vadd.f32 %v735, %v1435
    %v1452 = vadd.f32 %v736, %v1436
    %v1453 = vadd.f32 %v737, %v1437
    %v1454 = vadd.f32 %v738, %v1438
    %v1455 = vadd.f32 %v739, %v1439
    %v1456 = vadd.f32 %v740, %v1440
    %v1457 = vadd.f32 %v741, %v1441
    %v1458 = vadd.f32 %v742, %v1442
    %v1459 = vadd.f32 %v743, %v1443
    %v1460 = vadd.f32 %v744, %v1444
    %v1461 = vadd.f32 %v745, %v1445
    %v1462 = vadd.f32 %v746, %v1446
    %v1463 = vadd.f32 %v747, %v1447
    %v1464 = vadd.f32 %v748, %v1448
    %v1465 = vadd.f32 %v749, %v1449
    %1466 = vst [vmem:[#allocation3 + $0x80] sm:$0xff] %v1450
    %1467 = vst [vmem:[#allocation3 + $0x88] sm:$0xff] %v1451
    %1468 = vst [vmem:[#allocation3 + $0x90] sm:$0xff] %v1454
    %1469 = vst [vmem:[#allocation3 + $0x98] sm:$0xff] %v1455
    %1470 = vst [vmem:[#allocation3 + $0xa0] sm:$0xff] %v1458
    %1471 = vst [vmem:[#allocation3 + $0xa8] sm:$0xff] %v1459
    %1472 = vst [vmem:[#allocation3 + $0xb0] sm:$0xff] %v1462
    %1473 = vst [vmem:[#allocation3 + $0xb8] sm:$0xff] %v1463
    %1474 = vst [vmem:[%s54 + $0x80] sm:$0xff] %v1452
    %1475 = vst [vmem:[%s54 + $0x88] sm:$0xff] %v1453
    %1476 = vst [vmem:[%s54 + $0x90] sm:$0xff] %v1456
    %1477 = vst [vmem:[%s54 + $0x98] sm:$0xff] %v1457
    %1478 = vst [vmem:[%s54 + $0xa0] sm:$0xff] %v1460
    %1479 = vst [vmem:[%s54 + $0xa8] sm:$0xff] %v1461
    %1480 = vst [vmem:[%s54 + $0xb0] sm:$0xff] %v1464
    %1481 = vst [vmem:[%s54 + $0xb8] sm:$0xff] %v1465
    // Predicated region
    $region22: #{tpu_custom_call.1} parent=1 // pred_check
      _
    $region23: #{tpu_custom_call.1} parent=1 // pred_check_branch
      %1483 = sbr.rel (0) target = $region25
    $region24: #{tpu_custom_call.1} parent=1 // pred_region
      %s1485 = ssub.s32 6144, 6144
      %1486 = vsyncadd [#allocation4], %s1485
      %s1487 = sshll.u32 [#allocation3], 4
      %s1488 = int_to_ptr.vmem [resolvable:$true] %s1487
      %1493 = dma.vmem_to_hbm [thread:$0]  %s1488, 6144, %s5, [#allocation4], 256, 256, 16
    $region25: #{tpu_custom_call.1} parent=1 // pred_fallthru
      _
    // Predicated region
    $region26: #{tpu_custom_call.1} parent=1 // pred_check
      _
    $region27: #{tpu_custom_call.1} parent=1 // pred_check_branch
      %1495 = sbr.rel (0) target = $region29
    $region28: #{tpu_custom_call.1} parent=1 // pred_region
      %1496 = dma.done [#allocation4], 6144
    $region29: #{tpu_custom_call.1} parent=1 // pred_fallthru
      _
    %1497 = vsyncpa [#allocation4], 1

</llo_original>
